<compile_context>
chip_gen: v6e
topology: v6e:2x2x1
jax: 0.10.0
libtpu: 0.0.40
codegen_flags: <defaults>
</compile_context>

<pallas_src>
import functools

import jax
import jax.numpy as jnp
from jax.experimental import pallas as pl
from jax.experimental.pallas import tpu as pltpu

RSQRT2 = 0.7071067811865476  # 1/sqrt(2)


def _round_up(x, m):
    return ((x + m - 1) // m) * m


def _pad2(a, rows, cols):
    pr, pc = rows - a.shape[0], cols - a.shape[1]
    if pr == 0 and pc == 0:
        return a  # skip the pad entirely when already aligned (ViT-B/L/H dims are)
    return jnp.pad(a, ((0, pr), (0, pc)))


def _vit_mlp_kernel(x_ref, w1_ref, b1_ref, w2_ref, b2_ref, o_ref, *, act_dtype):
    mxu_dtype = w1_ref.dtype
    # In-kernel cast of the streamed row tile (VPU op hidden under the MXU; avoids a
    # separate full-array XLA cast pass over x in HBM).
    x = x_ref[...].astype(mxu_dtype)
    # dense1: MXU matmul with f32 accumulation.
    h = jnp.dot(x, w1_ref[...], preferred_element_type=jnp.float32)
    # bias + exact-erf GELU (matches nn.GELU(approximate='none')) in act_dtype.
    # act_dtype=bf16 halves the VALU cost on v6e/v7x, where the activation -- not the
    # MXU -- is the saturating VLIW slot; act_dtype=f32 is the strict-accuracy path.
    h = h.astype(act_dtype) + b1_ref[...].astype(act_dtype)
    h = 0.5 * h * (1.0 + jax.lax.erf(h * RSQRT2))
    # dropout1: identity (eval mode)
    # dense2: MXU matmul with f32 accumulation; bias add on the f32 accumulator.
    o = jnp.dot(h.astype(mxu_dtype), w2_ref[...], preferred_element_type=jnp.float32)
    o = o + b2_ref[...]
    # dropout2: identity (eval mode)
    o_ref[...] = o.astype(o_ref.dtype)


def vit_mlp(x, w1, b1, w2, b2, *, tm=512, mxu_dtype=jnp.bfloat16,
            out_dtype=None, feature_align=128):
    """x: (B, S, Din); w1: (Din, H); b1: (H,); w2: (H, Dout); b2: (Dout,).

    mxu_dtype=jnp.float32 is available as a strict-accuracy fallback.
    feature_align: lane padding granularity (use 256 on v6e/v7x for non-standard
    widths to keep the 256x256 MXU fully occupied; ViT-B/L dims are already aligned).
    """
    B, S, Din = x.shape
    H = w1.shape[1]
    Dout = w2.shape[1]
    M = B * S
    out_dtype = x.dtype if out_dtype is None else out_dtype

    # Lane-dense padding for all feature dims; rows padded to the row-tile size.
    Din_p = _round_up(Din, feature_align)
    H_p = _round_up(H, feature_align)
    Dout_p = _round_up(Dout, feature_align)

    # Row tile: as large as practical, but capped so the "parallel" row axis keeps at
    # least 2 grid steps (so v7x megacore can split rows across both TensorCores).
    M_r = _round_up(M, 8)
    tm = _round_up(max(tm, 8), 8)
    tm_cap = max(8, _round_up(pl.cdiv(M_r, 2), 8))
    tm_eff = min(tm, M_r, tm_cap)
    M_p = _round_up(M, tm_eff)

    # Zero padding is exact: padded x columns hit zero W1 rows; padded hidden columns
    # hit zero W2 rows; padded output columns / rows are sliced off at the end.
    x2 = _pad2(x.reshape(M, Din), M_p, Din_p)                 # native dtype, cast in-kernel
    w1_p = _pad2(w1, Din_p, H_p).astype(mxu_dtype)
    w2_p = _pad2(w2, H_p, Dout_p).astype(mxu_dtype)
    b1_p = _pad2(b1.reshape(1, H), 1, H_p).astype(jnp.float32)
    b2_p = _pad2(b2.reshape(1, Dout), 1, Dout_p).astype(jnp.float32)

    # VMEM budget estimate (conservative: assumes double-buffered weights), clamped to
    # ~90% of this generation's physical VMEM so the request is portable v5e/v6e/v7x.
    isz_w = jnp.dtype(mxu_dtype).itemsize
    isz_x = jnp.dtype(x.dtype).itemsize
    isz_o = jnp.dtype(out_dtype).itemsize
    resident = ((Din_p * H_p + H_p * Dout_p) * isz_w + (H_p + Dout_p) * 4)
    vmem_bytes = (
        2 * tm_eff * Din_p * isz_x          # x tile (double buffered)
        + 2 * tm_eff * Dout_p * isz_o       # out tile (double buffered)
        + 2 * resident                      # weights/biases (worst case: 2 buffers)
        + tm_eff * Din_p * isz_w            # in-kernel mxu-dtype copy of x tile
        + tm_eff * H_p * (4 + isz_w)        # f32 h accumulator + act-dtype h
    )
    try:
        vmem_cap = int(pltpu.get_tpu_info().vmem_capacity_bytes)
    except Exception:
        vmem_cap = 64 << 20                 # conservative: v7x has 64 MiB per TC
    vmem_limit = int(min(vmem_bytes + (8 << 20), int(0.9 * vmem_cap)))

    grid = (M_p // tm_eff,)

    def _resident_spec(shape, single_buffer):
        idx = lambda i: (0,) * len(shape)
        if single_buffer:
            # Grid-invariant operand: don't waste VMEM on an unused 2nd pipeline buffer.
            return pl.BlockSpec(shape, idx, pipeline_mode=pl.Buffered(1))
        return pl.BlockSpec(shape, idx)

    def _call(single_buffer_weights, act_dtype):
        kernel = functools.partial(_vit_mlp_kernel, act_dtype=act_dtype)
        return pl.pallas_call(
            kernel,
            out_shape=jax.ShapeDtypeStruct((M_p, Dout_p), out_dtype),
            grid_spec=pl.GridSpec(
                grid=grid,
                in_specs=[
                    pl.BlockSpec((tm_eff, Din_p), lambda i: (i, 0)),        # x (streamed)
                    _resident_spec((Din_p, H_p), single_buffer_weights),    # W1 (resident)
                    _resident_spec((1, H_p), single_buffer_weights),        # b1
                    _resident_spec((H_p, Dout_p), single_buffer_weights),   # W2 (resident)
                    _resident_spec((1, Dout_p), single_buffer_weights),     # b2
                ],
                out_specs=pl.BlockSpec((tm_eff, Dout_p), lambda i: (i, 0)),
            ),
            compiler_params=pltpu.CompilerParams(
                dimension_semantics=("parallel",),
                vmem_limit_bytes=vmem_limit,
            ),
        )(x2, w1_p, b1_p, w2_p, b2_p)

    # Preferred config first; fall back if this jax version / chip rejects
    # pipeline_mode=Buffered(1) or the bf16 erf lowering. All configs are
    # semantically equivalent (only perf / rounding differ).
    if jnp.dtype(mxu_dtype) == jnp.dtype(jnp.float32):
        act_candidates = [jnp.float32]
    else:
        act_candidates = [mxu_dtype, jnp.float32]
    configs = [(sb, adt) for sb in (True, False) for adt in act_candidates]

    out2 = None
    last_err = None
    for single_buf, adt in configs:
        try:
            out2 = _call(single_buf, adt)
            break
        except Exception as e:  # fall through to the next (strictly equivalent) config
            last_err = e
    if out2 is None:
        raise last_err

    return out2[:M, :Dout].reshape(B, S, Dout)


def reference_mlp(x, w1, b1, w2, b2):
    """Pure-JAX f32 reference (exact-erf GELU, eval-mode dropout)."""
    h = jnp.einsum("bsd,dh->bsh", x, w1) + b1
    h = 0.5 * h * (1.0 + jax.lax.erf(h * RSQRT2))
    return jnp.einsum("bsh,ho->bso", h, w2) + b2


if __name__ == "__main__":
    # Small shapes consistent with the module: batch=2, seq=8, in_dim=32,
    # mlp_num_hiddens=64, mlp_num_outputs=32 (padded to lane-dense dims internally).
    B, S, Din, H, Dout = 2, 8, 32, 64, 32

    key = jax.random.PRNGKey(0)
    kx, kw1, kb1, kw2, kb2 = jax.random.split(key, 5)

    x = jax.random.normal(kx, (B, S, Din), dtype=jnp.float32)
    # Deterministic parameter init (LazyLinear infers Din from x at first call).
    w1 = jax.random.normal(kw1, (Din, H), dtype=jnp.float32) * (1.0 / Din ** 0.5)
    b1 = jax.random.normal(kb1, (H,), dtype=jnp.float32) * 0.01
    w2 = jax.random.normal(kw2, (H, Dout), dtype=jnp.float32) * (1.0 / H ** 0.5)
    b2 = jax.random.normal(kb2, (Dout,), dtype=jnp.float32) * 0.01

    out = vit_mlp(x, w1, b1, w2, b2)
    out = jax.block_until_ready(out)

    ref = reference_mlp(x, w1, b1, w2, b2)
    assert out.shape == (B, S, Dout)
    # bf16 MXU operands + bf16 activation math (f32 accumulation) -> loosened tolerance
    # vs the f32 reference.
    assert jnp.allclose(out, ref, atol=5e-2, rtol=5e-2), "mismatch vs JAX reference"

    print("KERNEL_OK")
</pallas_src>

<mosaic_0001>
module attributes {stable_mosaic.version = 11 : i64} {
  func.func @_vit_mlp_kernel(%arg0: i32, %arg1: memref<8x128xf32, #tpu.memory_space<vmem>>, %arg2: memref<128x128xbf16, #tpu.memory_space<vmem>>, %arg3: memref<1x128xf32, #tpu.memory_space<vmem>>, %arg4: memref<128x128xbf16, #tpu.memory_space<vmem>>, %arg5: memref<1x128xf32, #tpu.memory_space<vmem>>, %arg6: memref<8x128xf32, #tpu.memory_space<vmem>>) attributes {dimension_semantics = [#tpu.dimension_semantics<parallel>], iteration_bounds = array<i64: 2>, scalar_prefetch = 0 : i64, scratch_operands = 0 : i64, tpu.core_type = #tpu.core_type<tc>, window_params = [{transform_indices = @transform_0, window_bounds = array<i64: 8, 128>}, {pipeline_mode = #tpu.pipeline_mode<synchronous>, transform_indices = @transform_1, window_bounds = array<i64: 128, 128>}, {pipeline_mode = #tpu.pipeline_mode<synchronous>, transform_indices = @transform_2, window_bounds = array<i64: 1, 128>}, {pipeline_mode = #tpu.pipeline_mode<synchronous>, transform_indices = @transform_3, window_bounds = array<i64: 128, 128>}, {pipeline_mode = #tpu.pipeline_mode<synchronous>, transform_indices = @transform_4, window_bounds = array<i64: 1, 128>}, {transform_indices = @transform_5, window_bounds = array<i64: 8, 128>}]} {
    %c0 = arith.constant 0 : index
    %c0_0 = arith.constant 0 : index
    %0 = vector.load %arg1[%c0, %c0_0] : memref<8x128xf32, #tpu.memory_space<vmem>>, vector<8x128xf32>
    %1 = arith.truncf %0 : vector<8x128xf32> to vector<8x128xbf16>
    %c0_1 = arith.constant 0 : index
    %c0_2 = arith.constant 0 : index
    %2 = vector.load %arg2[%c0_1, %c0_2] : memref<128x128xbf16, #tpu.memory_space<vmem>>, vector<128x128xbf16>
    %cst = arith.constant dense<0.000000e+00> : vector<8x128xf32>
    %3 = tpu.matmul %1, %2, %cst {dimension_numbers = #tpu.dot_dimension_numbers<[1], [0], [0], [1], [0, 0, 1, 1], [], []>} : vector<8x128xbf16>, vector<128x128xbf16>, vector<8x128xf32> -> vector<8x128xf32>
    %4 = arith.truncf %3 : vector<8x128xf32> to vector<8x128xbf16>
    %c0_3 = arith.constant 0 : index
    %c0_4 = arith.constant 0 : index
    %5 = vector.load %arg3[%c0_3, %c0_4] : memref<1x128xf32, #tpu.memory_space<vmem>>, vector<1x128xf32>
    %6 = arith.truncf %5 : vector<1x128xf32> to vector<1x128xbf16>
    %7 = vector.broadcast %6 : vector<1x128xbf16> to vector<8x128xbf16>
    %8 = arith.addf %4, %7 : vector<8x128xbf16>
    %cst_5 = arith.constant 5.000000e-01 : bf16
    %9 = vector.broadcast %cst_5 : bf16 to vector<8x128xbf16>
    %10 = arith.mulf %9, %8 : vector<8x128xbf16>
    %cst_6 = arith.constant 7.070310e-01 : bf16
    %11 = vector.broadcast %cst_6 : bf16 to vector<8x128xbf16>
    %12 = arith.mulf %8, %11 : vector<8x128xbf16>
    %13 = math.erf %12 : vector<8x128xbf16>
    %cst_7 = arith.constant 1.000000e+00 : bf16
    %14 = vector.broadcast %cst_7 : bf16 to vector<8x128xbf16>
    %15 = arith.addf %14, %13 : vector<8x128xbf16>
    %16 = arith.mulf %10, %15 : vector<8x128xbf16>
    %c0_8 = arith.constant 0 : index
    %c0_9 = arith.constant 0 : index
    %17 = vector.load %arg4[%c0_8, %c0_9] : memref<128x128xbf16, #tpu.memory_space<vmem>>, vector<128x128xbf16>
    %cst_10 = arith.constant dense<0.000000e+00> : vector<8x128xf32>
    %18 = tpu.matmul %16, %17, %cst_10 {dimension_numbers = #tpu.dot_dimension_numbers<[1], [0], [0], [1], [0, 0, 1, 1], [], []>} : vector<8x128xbf16>, vector<128x128xbf16>, vector<8x128xf32> -> vector<8x128xf32>
    %c0_11 = arith.constant 0 : index
    %c0_12 = arith.constant 0 : index
    %19 = vector.load %arg5[%c0_11, %c0_12] : memref<1x128xf32, #tpu.memory_space<vmem>>, vector<1x128xf32>
    %20 = vector.broadcast %19 : vector<1x128xf32> to vector<8x128xf32>
    %21 = arith.addf %18, %20 : vector<8x128xf32>
    %c0_13 = arith.constant 0 : index
    %c0_14 = arith.constant 0 : index
    %22 = vector.load %arg6[%c0_13, %c0_14] : memref<8x128xf32, #tpu.memory_space<vmem>>, vector<8x128xf32>
    tpu.vector_store %arg6[%c0_13, %c0_14], %21 {strides = array<i32>} : memref<8x128xf32, #tpu.memory_space<vmem>>, vector<8x128xf32>,
    return
  }
  func.func @transform_0(%arg0: i32) -> (i32, i32) {
    %c0_i32 = arith.constant 0 : i32
    %c0_i32_0 = arith.constant 0 : i32
    return %arg0, %c0_i32 : i32, i32
  }
  func.func @transform_1(%arg0: i32) -> (i32, i32) {
    %c0_i32 = arith.constant 0 : i32
    %c0_i32_0 = arith.constant 0 : i32
    %c0_i32_1 = arith.constant 0 : i32
    return %c0_i32, %c0_i32_0 : i32, i32
  }
  func.func @transform_2(%arg0: i32) -> (i32, i32) {
    %c0_i32 = arith.constant 0 : i32
    %c0_i32_0 = arith.constant 0 : i32
    %c0_i32_1 = arith.constant 0 : i32
    return %c0_i32, %c0_i32_0 : i32, i32
  }
  func.func @transform_3(%arg0: i32) -> (i32, i32) {
    %c0_i32 = arith.constant 0 : i32
    %c0_i32_0 = arith.constant 0 : i32
    %c0_i32_1 = arith.constant 0 : i32
    return %c0_i32, %c0_i32_0 : i32, i32
  }
  func.func @transform_4(%arg0: i32) -> (i32, i32) {
    %c0_i32 = arith.constant 0 : i32
    %c0_i32_0 = arith.constant 0 : i32
    %c0_i32_1 = arith.constant 0 : i32
    return %c0_i32, %c0_i32_0 : i32, i32
  }
  func.func @transform_5(%arg0: i32) -> (i32, i32) {
    %c0_i32 = arith.constant 0 : i32
    %c0_i32_0 = arith.constant 0 : i32
    return %arg0, %c0_i32 : i32, i32
  }
}

module attributes {stable_mosaic.version = 11 : i64} {
  func.func @_vit_mlp_kernel(%arg0: i32, %arg1: memref<8x128xf32, #tpu.memory_space<vmem>>, %arg2: memref<128x128xbf16, #tpu.memory_space<vmem>>, %arg3: memref<1x128xf32, #tpu.memory_space<vmem>>, %arg4: memref<128x128xbf16, #tpu.memory_space<vmem>>, %arg5: memref<1x128xf32, #tpu.memory_space<vmem>>, %arg6: memref<8x128xf32, #tpu.memory_space<vmem>>) attributes {dimension_semantics = [#tpu.dimension_semantics<parallel>], iteration_bounds = array<i64: 2>, scalar_prefetch = 0 : i64, scratch_operands = 0 : i64, tpu.core_type = #tpu.core_type<tc>, window_params = [{transform_indices = @transform_0, window_bounds = array<i64: 8, 128>}, {pipeline_mode = #tpu.pipeline_mode<synchronous>, transform_indices = @transform_1, window_bounds = array<i64: 128, 128>}, {pipeline_mode = #tpu.pipeline_mode<synchronous>, transform_indices = @transform_2, window_bounds = array<i64: 1, 128>}, {pipeline_mode = #tpu.pipeline_mode<synchronous>, transform_indices = @transform_3, window_bounds = array<i64: 128, 128>}, {pipeline_mode = #tpu.pipeline_mode<synchronous>, transform_indices = @transform_4, window_bounds = array<i64: 1, 128>}, {transform_indices = @transform_5, window_bounds = array<i64: 8, 128>}]} {
    %c0 = arith.constant 0 : index
    %c0_0 = arith.constant 0 : index
    %0 = vector.load %arg1[%c0, %c0_0] : memref<8x128xf32, #tpu.memory_space<vmem>>, vector<8x128xf32>
    %1 = arith.truncf %0 : vector<8x128xf32> to vector<8x128xbf16>
    %c0_1 = arith.constant 0 : index
    %c0_2 = arith.constant 0 : index
    %2 = vector.load %arg2[%c0_1, %c0_2] : memref<128x128xbf16, #tpu.memory_space<vmem>>, vector<128x128xbf16>
    %cst = arith.constant dense<0.000000e+00> : vector<8x128xf32>
    %3 = tpu.matmul %1, %2, %cst {dimension_numbers = #tpu.dot_dimension_numbers<[1], [0], [0], [1], [0, 0, 1, 1], [], []>} : vector<8x128xbf16>, vector<128x128xbf16>, vector<8x128xf32> -> vector<8x128xf32>
    %c0_3 = arith.constant 0 : index
    %c0_4 = arith.constant 0 : index
    %4 = vector.load %arg3[%c0_3, %c0_4] : memref<1x128xf32, #tpu.memory_space<vmem>>, vector<1x128xf32>
    %5 = vector.broadcast %4 : vector<1x128xf32> to vector<8x128xf32>
    %6 = arith.addf %3, %5 : vector<8x128xf32>
    %cst_5 = arith.constant 5.000000e-01 : f32
    %7 = vector.broadcast %cst_5 : f32 to vector<8x128xf32>
    %8 = arith.mulf %7, %6 : vector<8x128xf32>
    %cst_6 = arith.constant 0.707106769 : f32
    %9 = vector.broadcast %cst_6 : f32 to vector<8x128xf32>
    %10 = arith.mulf %6, %9 : vector<8x128xf32>
    %11 = math.erf %10 : vector<8x128xf32>
    %cst_7 = arith.constant 1.000000e+00 : f32
    %12 = vector.broadcast %cst_7 : f32 to vector<8x128xf32>
    %13 = arith.addf %12, %11 : vector<8x128xf32>
    %14 = arith.mulf %8, %13 : vector<8x128xf32>
    %15 = arith.truncf %14 : vector<8x128xf32> to vector<8x128xbf16>
    %c0_8 = arith.constant 0 : index
    %c0_9 = arith.constant 0 : index
    %16 = vector.load %arg4[%c0_8, %c0_9] : memref<128x128xbf16, #tpu.memory_space<vmem>>, vector<128x128xbf16>
    %cst_10 = arith.constant dense<0.000000e+00> : vector<8x128xf32>
    %17 = tpu.matmul %15, %16, %cst_10 {dimension_numbers = #tpu.dot_dimension_numbers<[1], [0], [0], [1], [0, 0, 1, 1], [], []>} : vector<8x128xbf16>, vector<128x128xbf16>, vector<8x128xf32> -> vector<8x128xf32>
    %c0_11 = arith.constant 0 : index
    %c0_12 = arith.constant 0 : index
    %18 = vector.load %arg5[%c0_11, %c0_12] : memref<1x128xf32, #tpu.memory_space<vmem>>, vector<1x128xf32>
    %19 = vector.broadcast %18 : vector<1x128xf32> to vector<8x128xf32>
    %20 = arith.addf %17, %19 : vector<8x128xf32>
    %c0_13 = arith.constant 0 : index
    %c0_14 = arith.constant 0 : index
    %21 = vector.load %arg6[%c0_13, %c0_14] : memref<8x128xf32, #tpu.memory_space<vmem>>, vector<8x128xf32>
    tpu.vector_store %arg6[%c0_13, %c0_14], %20 {strides = array<i32>} : memref<8x128xf32, #tpu.memory_space<vmem>>, vector<8x128xf32>,
    return
  }
  func.func @transform_0(%arg0: i32) -> (i32, i32) {
    %c0_i32 = arith.constant 0 : i32
    %c0_i32_0 = arith.constant 0 : i32
    return %arg0, %c0_i32 : i32, i32
  }
  func.func @transform_1(%arg0: i32) -> (i32, i32) {
    %c0_i32 = arith.constant 0 : i32
    %c0_i32_0 = arith.constant 0 : i32
    %c0_i32_1 = arith.constant 0 : i32
    return %c0_i32, %c0_i32_0 : i32, i32
  }
  func.func @transform_2(%arg0: i32) -> (i32, i32) {
    %c0_i32 = arith.constant 0 : i32
    %c0_i32_0 = arith.constant 0 : i32
    %c0_i32_1 = arith.constant 0 : i32
    return %c0_i32, %c0_i32_0 : i32, i32
  }
  func.func @transform_3(%arg0: i32) -> (i32, i32) {
    %c0_i32 = arith.constant 0 : i32
    %c0_i32_0 = arith.constant 0 : i32
    %c0_i32_1 = arith.constant 0 : i32
    return %c0_i32, %c0_i32_0 : i32, i32
  }
  func.func @transform_4(%arg0: i32) -> (i32, i32) {
    %c0_i32 = arith.constant 0 : i32
    %c0_i32_0 = arith.constant 0 : i32
    %c0_i32_1 = arith.constant 0 : i32
    return %c0_i32, %c0_i32_0 : i32, i32
  }
  func.func @transform_5(%arg0: i32) -> (i32, i32) {
    %c0_i32 = arith.constant 0 : i32
    %c0_i32_0 = arith.constant 0 : i32
    return %arg0, %c0_i32 : i32, i32
  }
}

module attributes {stable_mosaic.version = 11 : i64} {
  func.func @_vit_mlp_kernel(%arg0: i32, %arg1: memref<8x128xf32, #tpu.memory_space<vmem>>, %arg2: memref<128x128xbf16, #tpu.memory_space<vmem>>, %arg3: memref<1x128xf32, #tpu.memory_space<vmem>>, %arg4: memref<128x128xbf16, #tpu.memory_space<vmem>>, %arg5: memref<1x128xf32, #tpu.memory_space<vmem>>, %arg6: memref<8x128xf32, #tpu.memory_space<vmem>>) attributes {dimension_semantics = [#tpu.dimension_semantics<parallel>], iteration_bounds = array<i64: 2>, scalar_prefetch = 0 : i64, scratch_operands = 0 : i64, tpu.core_type = #tpu.core_type<tc>, window_params = [{transform_indices = @transform_0, window_bounds = array<i64: 8, 128>}, {pipeline_mode = #tpu.pipeline_mode<synchronous>, transform_indices = @transform_1, window_bounds = array<i64: 128, 128>}, {pipeline_mode = #tpu.pipeline_mode<synchronous>, transform_indices = @transform_2, window_bounds = array<i64: 1, 128>}, {pipeline_mode = #tpu.pipeline_mode<synchronous>, transform_indices = @transform_3, window_bounds = array<i64: 128, 128>}, {pipeline_mode = #tpu.pipeline_mode<synchronous>, transform_indices = @transform_4, window_bounds = array<i64: 1, 128>}, {transform_indices = @transform_5, window_bounds = array<i64: 8, 128>}]} {
    %c0 = arith.constant 0 : index
    %c0_0 = arith.constant 0 : index
    %0 = vector.load %arg1[%c0, %c0_0] : memref<8x128xf32, #tpu.memory_space<vmem>>, vector<8x128xf32>
    %1 = arith.truncf %0 : vector<8x128xf32> to vector<8x128xbf16>
    %c0_1 = arith.constant 0 : index
    %c0_2 = arith.constant 0 : index
    %2 = vector.load %arg2[%c0_1, %c0_2] : memref<128x128xbf16, #tpu.memory_space<vmem>>, vector<128x128xbf16>
    %cst = arith.constant dense<0.000000e+00> : vector<8x128xf32>
    %3 = tpu.matmul %1, %2, %cst {dimension_numbers = #tpu.dot_dimension_numbers<[1], [0], [0], [1], [0, 0, 1, 1], [], []>} : vector<8x128xbf16>, vector<128x128xbf16>, vector<8x128xf32> -> vector<8x128xf32>
    %4 = arith.truncf %3 : vector<8x128xf32> to vector<8x128xbf16>
    %c0_3 = arith.constant 0 : index
    %c0_4 = arith.constant 0 : index
    %5 = vector.load %arg3[%c0_3, %c0_4] : memref<1x128xf32, #tpu.memory_space<vmem>>, vector<1x128xf32>
    %6 = arith.truncf %5 : vector<1x128xf32> to vector<1x128xbf16>
    %7 = vector.broadcast %6 : vector<1x128xbf16> to vector<8x128xbf16>
    %8 = arith.addf %4, %7 : vector<8x128xbf16>
    %cst_5 = arith.constant 5.000000e-01 : bf16
    %9 = vector.broadcast %cst_5 : bf16 to vector<8x128xbf16>
    %10 = arith.mulf %9, %8 : vector<8x128xbf16>
    %cst_6 = arith.constant 7.070310e-01 : bf16
    %11 = vector.broadcast %cst_6 : bf16 to vector<8x128xbf16>
    %12 = arith.mulf %8, %11 : vector<8x128xbf16>
    %13 = math.erf %12 : vector<8x128xbf16>
    %cst_7 = arith.constant 1.000000e+00 : bf16
    %14 = vector.broadcast %cst_7 : bf16 to vector<8x128xbf16>
    %15 = arith.addf %14, %13 : vector<8x128xbf16>
    %16 = arith.mulf %10, %15 : vector<8x128xbf16>
    %c0_8 = arith.constant 0 : index
    %c0_9 = arith.constant 0 : index
    %17 = vector.load %arg4[%c0_8, %c0_9] : memref<128x128xbf16, #tpu.memory_space<vmem>>, vector<128x128xbf16>
    %cst_10 = arith.constant dense<0.000000e+00> : vector<8x128xf32>
    %18 = tpu.matmul %16, %17, %cst_10 {dimension_numbers = #tpu.dot_dimension_numbers<[1], [0], [0], [1], [0, 0, 1, 1], [], []>} : vector<8x128xbf16>, vector<128x128xbf16>, vector<8x128xf32> -> vector<8x128xf32>
    %c0_11 = arith.constant 0 : index
    %c0_12 = arith.constant 0 : index
    %19 = vector.load %arg5[%c0_11, %c0_12] : memref<1x128xf32, #tpu.memory_space<vmem>>, vector<1x128xf32>
    %20 = vector.broadcast %19 : vector<1x128xf32> to vector<8x128xf32>
    %21 = arith.addf %18, %20 : vector<8x128xf32>
    %c0_13 = arith.constant 0 : index
    %c0_14 = arith.constant 0 : index
    %22 = vector.load %arg6[%c0_13, %c0_14] : memref<8x128xf32, #tpu.memory_space<vmem>>, vector<8x128xf32>
    tpu.vector_store %arg6[%c0_13, %c0_14], %21 {strides = array<i32>} : memref<8x128xf32, #tpu.memory_space<vmem>>, vector<8x128xf32>,
    return
  }
  func.func @transform_0(%arg0: i32) -> (i32, i32) {
    %c0_i32 = arith.constant 0 : i32
    %c0_i32_0 = arith.constant 0 : i32
    return %arg0, %c0_i32 : i32, i32
  }
  func.func @transform_1(%arg0: i32) -> (i32, i32) {
    %c0_i32 = arith.constant 0 : i32
    %c0_i32_0 = arith.constant 0 : i32
    %c0_i32_1 = arith.constant 0 : i32
    return %c0_i32, %c0_i32_0 : i32, i32
  }
  func.func @transform_2(%arg0: i32) -> (i32, i32) {
    %c0_i32 = arith.constant 0 : i32
    %c0_i32_0 = arith.constant 0 : i32
    %c0_i32_1 = arith.constant 0 : i32
    return %c0_i32, %c0_i32_0 : i32, i32
  }
  func.func @transform_3(%arg0: i32) -> (i32, i32) {
    %c0_i32 = arith.constant 0 : i32
    %c0_i32_0 = arith.constant 0 : i32
    %c0_i32_1 = arith.constant 0 : i32
    return %c0_i32, %c0_i32_0 : i32, i32
  }
  func.func @transform_4(%arg0: i32) -> (i32, i32) {
    %c0_i32 = arith.constant 0 : i32
    %c0_i32_0 = arith.constant 0 : i32
    %c0_i32_1 = arith.constant 0 : i32
    return %c0_i32, %c0_i32_0 : i32, i32
  }
  func.func @transform_5(%arg0: i32) -> (i32, i32) {
    %c0_i32 = arith.constant 0 : i32
    %c0_i32_0 = arith.constant 0 : i32
    return %arg0, %c0_i32 : i32, i32
  }
}

module attributes {stable_mosaic.version = 11 : i64} {
  func.func @_vit_mlp_kernel(%arg0: i32, %arg1: memref<8x128xf32, #tpu.memory_space<vmem>>, %arg2: memref<128x128xbf16, #tpu.memory_space<vmem>>, %arg3: memref<1x128xf32, #tpu.memory_space<vmem>>, %arg4: memref<128x128xbf16, #tpu.memory_space<vmem>>, %arg5: memref<1x128xf32, #tpu.memory_space<vmem>>, %arg6: memref<8x128xf32, #tpu.memory_space<vmem>>) attributes {dimension_semantics = [#tpu.dimension_semantics<parallel>], iteration_bounds = array<i64: 2>, scalar_prefetch = 0 : i64, scratch_operands = 0 : i64, tpu.core_type = #tpu.core_type<tc>, window_params = [{transform_indices = @transform_0, window_bounds = array<i64: 8, 128>}, {pipeline_mode = #tpu.pipeline_mode<synchronous>, transform_indices = @transform_1, window_bounds = array<i64: 128, 128>}, {pipeline_mode = #tpu.pipeline_mode<synchronous>, transform_indices = @transform_2, window_bounds = array<i64: 1, 128>}, {pipeline_mode = #tpu.pipeline_mode<synchronous>, transform_indices = @transform_3, window_bounds = array<i64: 128, 128>}, {pipeline_mode = #tpu.pipeline_mode<synchronous>, transform_indices = @transform_4, window_bounds = array<i64: 1, 128>}, {transform_indices = @transform_5, window_bounds = array<i64: 8, 128>}]} {
    %c0 = arith.constant 0 : index
    %c0_0 = arith.constant 0 : index
    %0 = vector.load %arg1[%c0, %c0_0] : memref<8x128xf32, #tpu.memory_space<vmem>>, vector<8x128xf32>
    %1 = arith.truncf %0 : vector<8x128xf32> to vector<8x128xbf16>
    %c0_1 = arith.constant 0 : index
    %c0_2 = arith.constant 0 : index
    %2 = vector.load %arg2[%c0_1, %c0_2] : memref<128x128xbf16, #tpu.memory_space<vmem>>, vector<128x128xbf16>
    %cst = arith.constant dense<0.000000e+00> : vector<8x128xf32>
    %3 = tpu.matmul %1, %2, %cst {dimension_numbers = #tpu.dot_dimension_numbers<[1], [0], [0], [1], [0, 0, 1, 1], [], []>} : vector<8x128xbf16>, vector<128x128xbf16>, vector<8x128xf32> -> vector<8x128xf32>
    %c0_3 = arith.constant 0 : index
    %c0_4 = arith.constant 0 : index
    %4 = vector.load %arg3[%c0_3, %c0_4] : memref<1x128xf32, #tpu.memory_space<vmem>>, vector<1x128xf32>
    %5 = vector.broadcast %4 : vector<1x128xf32> to vector<8x128xf32>
    %6 = arith.addf %3, %5 : vector<8x128xf32>
    %cst_5 = arith.constant 5.000000e-01 : f32
    %7 = vector.broadcast %cst_5 : f32 to vector<8x128xf32>
    %8 = arith.mulf %7, %6 : vector<8x128xf32>
    %cst_6 = arith.constant 0.707106769 : f32
    %9 = vector.broadcast %cst_6 : f32 to vector<8x128xf32>
    %10 = arith.mulf %6, %9 : vector<8x128xf32>
    %11 = math.erf %10 : vector<8x128xf32>
    %cst_7 = arith.constant 1.000000e+00 : f32
    %12 = vector.broadcast %cst_7 : f32 to vector<8x128xf32>
    %13 = arith.addf %12, %11 : vector<8x128xf32>
    %14 = arith.mulf %8, %13 : vector<8x128xf32>
    %15 = arith.truncf %14 : vector<8x128xf32> to vector<8x128xbf16>
    %c0_8 = arith.constant 0 : index
    %c0_9 = arith.constant 0 : index
    %16 = vector.load %arg4[%c0_8, %c0_9] : memref<128x128xbf16, #tpu.memory_space<vmem>>, vector<128x128xbf16>
    %cst_10 = arith.constant dense<0.000000e+00> : vector<8x128xf32>
    %17 = tpu.matmul %15, %16, %cst_10 {dimension_numbers = #tpu.dot_dimension_numbers<[1], [0], [0], [1], [0, 0, 1, 1], [], []>} : vector<8x128xbf16>, vector<128x128xbf16>, vector<8x128xf32> -> vector<8x128xf32>
    %c0_11 = arith.constant 0 : index
    %c0_12 = arith.constant 0 : index
    %18 = vector.load %arg5[%c0_11, %c0_12] : memref<1x128xf32, #tpu.memory_space<vmem>>, vector<1x128xf32>
    %19 = vector.broadcast %18 : vector<1x128xf32> to vector<8x128xf32>
    %20 = arith.addf %17, %19 : vector<8x128xf32>
    %c0_13 = arith.constant 0 : index
    %c0_14 = arith.constant 0 : index
    %21 = vector.load %arg6[%c0_13, %c0_14] : memref<8x128xf32, #tpu.memory_space<vmem>>, vector<8x128xf32>
    tpu.vector_store %arg6[%c0_13, %c0_14], %20 {strides = array<i32>} : memref<8x128xf32, #tpu.memory_space<vmem>>, vector<8x128xf32>,
    return
  }
  func.func @transform_0(%arg0: i32) -> (i32, i32) {
    %c0_i32 = arith.constant 0 : i32
    %c0_i32_0 = arith.constant 0 : i32
    return %arg0, %c0_i32 : i32, i32
  }
  func.func @transform_1(%arg0: i32) -> (i32, i32) {
    %c0_i32 = arith.constant 0 : i32
    %c0_i32_0 = arith.constant 0 : i32
    %c0_i32_1 = arith.constant 0 : i32
    return %c0_i32, %c0_i32_0 : i32, i32
  }
  func.func @transform_2(%arg0: i32) -> (i32, i32) {
    %c0_i32 = arith.constant 0 : i32
    %c0_i32_0 = arith.constant 0 : i32
    %c0_i32_1 = arith.constant 0 : i32
    return %c0_i32, %c0_i32_0 : i32, i32
  }
  func.func @transform_3(%arg0: i32) -> (i32, i32) {
    %c0_i32 = arith.constant 0 : i32
    %c0_i32_0 = arith.constant 0 : i32
    %c0_i32_1 = arith.constant 0 : i32
    return %c0_i32, %c0_i32_0 : i32, i32
  }
  func.func @transform_4(%arg0: i32) -> (i32, i32) {
    %c0_i32 = arith.constant 0 : i32
    %c0_i32_0 = arith.constant 0 : i32
    %c0_i32_1 = arith.constant 0 : i32
    return %c0_i32, %c0_i32_0 : i32, i32
  }
  func.func @transform_5(%arg0: i32) -> (i32, i32) {
    %c0_i32 = arith.constant 0 : i32
    %c0_i32_0 = arith.constant 0 : i32
    return %arg0, %c0_i32 : i32, i32
  }
}

</mosaic_0001>

<llo_original>
// kernel: tpu_custom_call.1
$region0: #{tpu_custom_call.1}
  #allocation0 [shape = 'u32[]', space=smem, size = 0x4, offset = 0x4, fixed_abs, tag = 'smem constant byte address 0x4 - core index']
  #allocation1 [shape = 'u32[144,128]{1,0:T(1,128)}', space=vmem, size = 0x12000, scoped, tag = 'internal scratch']
  %s0 = inlined_call_operand.hbm [shape: f32[16,128], index: 0, kind: input, shape index: {}]
  %s1 = inlined_call_operand.hbm [shape: bf16[128,128], index: 1, kind: input, shape index: {}]
  %s2 = inlined_call_operand.vmem [shape: f32[1,128], index: 2, kind: input, shape index: {}]
  %s3 = inlined_call_operand.hbm [shape: bf16[128,128], index: 3, kind: input, shape index: {}]
  %s4 = inlined_call_operand.vmem [shape: f32[1,128], index: 4, kind: input, shape index: {}]
  %s5 = inlined_call_operand.hbm [shape: f32[16,128], index: 5, kind: output, shape index: {}]
  %s6 = sld [smem:[#allocation0]]
  $region65: #{tpu_custom_call.1} parent=0
    _
  %s8 = ssub.s32 1, %s6
  %s9 = scalar_select 0, %s8, %s6
  $region1: #{tpu_custom_call.1} parent=0
    #allocation2 [shape = 'u8[8192]{0}', space=vmem, size = 0x2000, scoped, tag = 'input window, operand 0']
    #allocation3 [shape = 's32[2]{0}', space=sflag, size = 0x8, scoped, tag = 'scoped memory for tpu_custom_call.1']
    #allocation4 [shape = 's32[2]{0}', space=sflag, size = 0x8, scoped, tag = 'scoped memory for tpu_custom_call.1']
    #allocation5 [shape = 'u8[32768]{0}', space=vmem, size = 0x8000, scoped, tag = 'input window, operand 1, single buffered']
    #allocation6 [shape = 's32[1]{0}', space=sflag, size = 0x4, scoped, tag = 'scoped memory for tpu_custom_call.1']
    #allocation7 [shape = 'u8[32768]{0}', space=vmem, size = 0x8000, scoped, tag = 'input window, operand 3, single buffered']
    #allocation8 [shape = 'u8[8192]{0}', space=vmem, size = 0x2000, scoped, tag = 'output window, operand 0']
    %10 = vsyncpa [#allocation3], 0
    %s11 = scalar_lea.sflag [#allocation3], 1
    %12 = vsyncpa %s11, 0
    %13 = vsyncpa [#allocation6], 0
    %14 = vsyncpa [#allocation4], 0
    %s15 = scalar_lea.sflag [#allocation4], 1
    %16 = vsyncpa %s15, 0
    loop: start=0, step=1, limit=4
    $region2: #{tpu_custom_call.1} parent=1 // loop_pre_header
      _
    $region3: #{tpu_custom_call.1} parent=1 // loop_header
      %s18 = sphi 0, %s22
      %p19 = scmp.ge.s32.totalorder %s18, 4
      %s28 = sphi 0, %s30
      %s31 = sphi 0, %s28
      %s32 = sphi 0, %s31
      %s48 = sphi 0, %s32
      %s52 = sphi 0, %s52
      %s54 = sphi 0, %s52
      %s55 = sphi 0, %s54
      %s69 = sphi 0, %s55
      %s73 = sphi 0, %s73
      %s75 = sphi 0, %s73
      %s76 = sphi 0, %s75
      %s90 = sphi 0, %s76
      %s94 = sphi 0, %s94
      %s96 = sphi 0, %s94
      %s97 = sphi 0, %s96
      %s111 = sphi 0, %s97
      %s115 = sphi 0, %s115
      %s117 = sphi 0, %s115
      %s118 = sphi 0, %s117
      %s132 = sphi 0, %s118
      %s138 = sphi 0, %s140
      %s141 = sphi 0, %s138
      %s142 = sphi 0, %s141
      %s158 = sphi 0, %s142
    $region4: #{tpu_custom_call.1} parent=1 // loop_header_branch
      %21 = sbr.rel (%p19) target = $region8
    $region5: #{tpu_custom_call.1} parent=1 // loop_body
      %s23 = ssub.s32 %s18, 1
      %s24 = ssub.s32 %s18, 2
      %s25 = sadd.s32 %s18, 1
      %s26 = ssub.s32 %s18, %s25
      %p27 = scmp.eq.s32.totalorder %s26, 0
      %s29 = sadd.s32 %s28, 1
      %s30 = scalar_select %p27, %s28, %s29
      %p33 = pneg %p27
      %p34 = scmp.eq.s32.totalorder %s18, 1
      %p35 = por %p33, %p34
      %p36 = scmp.ne.s32.totalorder %s28, %s31
      %p37 = scmp.eq.s32.totalorder %s18, 0
      %p38 = por %p36, %p37
      %p39 = scmp.ne.s32.totalorder %s28, %s31
      %p40 = scmp.eq.s32.totalorder %s23, 1
      %p41 = por %p39, %p40
      %p42 = scmp.ne.s32.totalorder %s31, %s32
      %p43 = scmp.eq.s32.totalorder %s23, 0
      %p44 = por %p42, %p43
      %p45 = scmp.ne.s32.totalorder %s31, %s32
      %p46 = scmp.eq.s32.totalorder %s24, 1
      %p47 = por %p45, %p46
      %p49 = scmp.ne.s32.totalorder %s32, %s48
      %p50 = scmp.eq.s32.totalorder %s24, 0
      %p51 = por %p49, %p50
      %s53 = sadd.s32 %s52, 1
      %p56 = scmp.eq.s32.totalorder %s18, 1
      %p57 = scmp.ne.s32.totalorder %s52, %s54
      %p58 = scmp.eq.s32.totalorder %s18, 0
      %p59 = por %p57, %p58
      %p60 = scmp.ne.s32.totalorder %s52, %s54
      %p61 = scmp.eq.s32.totalorder %s23, 1
      %p62 = por %p60, %p61
      %p63 = scmp.ne.s32.totalorder %s54, %s55
      %p64 = scmp.eq.s32.totalorder %s23, 0
      %p65 = por %p63, %p64
      %p66 = scmp.ne.s32.totalorder %s54, %s55
      %p67 = scmp.eq.s32.totalorder %s24, 1
      %p68 = por %p66, %p67
      %p70 = scmp.ne.s32.totalorder %s55, %s69
      %p71 = scmp.eq.s32.totalorder %s24, 0
      %p72 = por %p70, %p71
      %s74 = sadd.s32 %s73, 1
      %p77 = scmp.eq.s32.totalorder %s18, 1
      %p78 = scmp.ne.s32.totalorder %s73, %s75
      %p79 = scmp.eq.s32.totalorder %s18, 0
      %p80 = por %p78, %p79
      %p81 = scmp.ne.s32.totalorder %s73, %s75
      %p82 = scmp.eq.s32.totalorder %s23, 1
      %p83 = por %p81, %p82
      %p84 = scmp.ne.s32.totalorder %s75, %s76
      %p85 = scmp.eq.s32.totalorder %s23, 0
      %p86 = por %p84, %p85
      %p87 = scmp.ne.s32.totalorder %s75, %s76
      %p88 = scmp.eq.s32.totalorder %s24, 1
      %p89 = por %p87, %p88
      %p91 = scmp.ne.s32.totalorder %s76, %s90
      %p92 = scmp.eq.s32.totalorder %s24, 0
      %p93 = por %p91, %p92
      %s95 = sadd.s32 %s94, 1
      %p98 = scmp.eq.s32.totalorder %s18, 1
      %p99 = scmp.ne.s32.totalorder %s94, %s96
      %p100 = scmp.eq.s32.totalorder %s18, 0
      %p101 = por %p99, %p100
      %p102 = scmp.ne.s32.totalorder %s94, %s96
      %p103 = scmp.eq.s32.totalorder %s23, 1
      %p104 = por %p102, %p103
      %p105 = scmp.ne.s32.totalorder %s96, %s97
      %p106 = scmp.eq.s32.totalorder %s23, 0
      %p107 = por %p105, %p106
      %p108 = scmp.ne.s32.totalorder %s96, %s97
      %p109 = scmp.eq.s32.totalorder %s24, 1
      %p110 = por %p108, %p109
      %p112 = scmp.ne.s32.totalorder %s97, %s111
      %p113 = scmp.eq.s32.totalorder %s24, 0
      %p114 = por %p112, %p113
      %s116 = sadd.s32 %s115, 1
      %p119 = scmp.eq.s32.totalorder %s18, 1
      %p120 = scmp.ne.s32.totalorder %s115, %s117
      %p121 = scmp.eq.s32.totalorder %s18, 0
      %p122 = por %p120, %p121
      %p123 = scmp.ne.s32.totalorder %s115, %s117
      %p124 = scmp.eq.s32.totalorder %s23, 1
      %p125 = por %p123, %p124
      %p126 = scmp.ne.s32.totalorder %s117, %s118
      %p127 = scmp.eq.s32.totalorder %s23, 0
      %p128 = por %p126, %p127
      %p129 = scmp.ne.s32.totalorder %s117, %s118
      %p130 = scmp.eq.s32.totalorder %s24, 1
      %p131 = por %p129, %p130
      %p133 = scmp.ne.s32.totalorder %s118, %s132
      %p134 = scmp.eq.s32.totalorder %s24, 0
      %p135 = por %p133, %p134
      %s136 = ssub.s32 %s18, %s25
      %p137 = scmp.eq.s32.totalorder %s136, 0
      %s139 = sadd.s32 %s138, 1
      %s140 = scalar_select %p137, %s138, %s139
      %p143 = pneg %p137
      %p144 = scmp.eq.s32.totalorder %s18, 1
      %p145 = por %p143, %p144
      %p146 = scmp.ne.s32.totalorder %s138, %s141
      %p147 = scmp.eq.s32.totalorder %s18, 0
      %p148 = por %p146, %p147
      %p149 = scmp.ne.s32.totalorder %s138, %s141
      %p150 = scmp.eq.s32.totalorder %s23, 1
      %p151 = por %p149, %p150
      %p152 = scmp.ne.s32.totalorder %s141, %s142
      %p153 = scmp.eq.s32.totalorder %s23, 0
      %p154 = por %p152, %p153
      %p155 = scmp.ne.s32.totalorder %s141, %s142
      %p156 = scmp.eq.s32.totalorder %s24, 1
      %p157 = por %p155, %p156
      %p159 = scmp.ne.s32.totalorder %s142, %s158
      %p160 = scmp.eq.s32.totalorder %s24, 0
      %p161 = por %p159, %p160
      %p162 = scmp.le.s32.totalorder 1, %s18
      %p163 = scmp.lt.s32.totalorder %s18, 3
      %p164 = pnand %p162, %p163
      %p165 = pneg %p164
      // Predicated region
      $region9: #{tpu_custom_call.1} parent=5 // pred_check
        _
      $region10: #{tpu_custom_call.1} parent=5 // pred_check_branch
        %167 = sbr.rel (%p164) target = $region12
      $region11: #{tpu_custom_call.1} parent=5 // pred_region
        %s168 = ssub.s32 %s18, 1
        // Predicated region
        $region13: #{tpu_custom_call.1} parent=11 // pred_check
          %p169 = pneg %p65
        $region14: #{tpu_custom_call.1} parent=11 // pred_check_branch
          %171 = sbr.rel (%p169) target = $region16
        $region15: #{tpu_custom_call.1} parent=11 // pred_region
          %s173 = ssub.s32 1024, 1024
          %174 = vsyncadd [#allocation6], %s173
          %s175 = sshll.u32 [#allocation5], 4
          %s176 = int_to_ptr.vmem [resolvable:$true] %s175
          %181 = dma.hbm_to_vmem [thread:$0]  %s1, 1024, %s176, [#allocation6], 64, 64, 4
        $region16: #{tpu_custom_call.1} parent=11 // pred_fallthru
          _
        // Predicated region
        $region17: #{tpu_custom_call.1} parent=11 // pred_check
          %p182 = pneg %p86
        $region18: #{tpu_custom_call.1} parent=11 // pred_check_branch
          %184 = sbr.rel (%p182) target = $region20
        $region19: #{tpu_custom_call.1} parent=11 // pred_region
          _
        $region20: #{tpu_custom_call.1} parent=11 // pred_fallthru
          _
        // Predicated region
        $region21: #{tpu_custom_call.1} parent=11 // pred_check
          %p185 = pneg %p107
        $region22: #{tpu_custom_call.1} parent=11 // pred_check_branch
          %187 = sbr.rel (%p185) target = $region24
        $region23: #{tpu_custom_call.1} parent=11 // pred_region
          %s189 = ssub.s32 1024, 1024
          %190 = vsyncadd [#allocation6], %s189
          %s191 = sshll.u32 [#allocation7], 4
          %s192 = int_to_ptr.vmem [resolvable:$true] %s191
          %197 = dma.hbm_to_vmem [thread:$0]  %s3, 1024, %s192, [#allocation6], 64, 64, 4
        $region24: #{tpu_custom_call.1} parent=11 // pred_fallthru
          _
        // Predicated region
        $region25: #{tpu_custom_call.1} parent=11 // pred_check
          %p198 = pneg %p128
        $region26: #{tpu_custom_call.1} parent=11 // pred_check_branch
          %200 = sbr.rel (%p198) target = $region28
        $region27: #{tpu_custom_call.1} parent=11 // pred_region
          _
        $region28: #{tpu_custom_call.1} parent=11 // pred_fallthru
          _
      $region12: #{tpu_custom_call.1} parent=5 // pred_fallthru
        _
      %p201 = scmp.lt.s32.totalorder %s18, 2
      // Predicated region
      $region29: #{tpu_custom_call.1} parent=5 // pred_check
        %p202 = pneg %p201
      $region30: #{tpu_custom_call.1} parent=5 // pred_check_branch
        %204 = sbr.rel (%p202) target = $region32
      $region31: #{tpu_custom_call.1} parent=5 // pred_region
        // Predicated region
        $region33: #{tpu_custom_call.1} parent=31 // pred_check
          %p205 = pneg %p38
        $region34: #{tpu_custom_call.1} parent=31 // pred_check_branch
          %207 = sbr.rel (%p205) target = $region36
        $region35: #{tpu_custom_call.1} parent=31 // pred_region
          %s208 = sand.u32 %s28, 1
          %s209 = scalar_lea.sflag [#allocation3], %s208
          %s210 = sand.u32 %s28, 1
          %s211 = smul.addr %s210, 8
          %s212 = scalar_lea.vmem [#allocation2], %s211
          %s214 = ssub.s32 128, 128
          %215 = vsyncadd %s209, %s214
          %s216 = smul.addr %s18, 128
          %s217 = scalar_lea.hbm %s0, %s216
          %s219 = sshll.u32 %s212, 4
          %s220 = int_to_ptr.vmem [resolvable:$true] %s219
          %222 = dma.hbm_to_vmem [thread:$0]  %s217, 128, %s220, %s209
        $region36: #{tpu_custom_call.1} parent=31 // pred_fallthru
          _
      $region32: #{tpu_custom_call.1} parent=5 // pred_fallthru
        _
      %p223 = scmp.le.s32.totalorder 1, %s18
      %p224 = scmp.lt.s32.totalorder %s18, 3
      %p225 = pnand %p223, %p224
      %p226 = pneg %p225
      // Predicated region
      $region37: #{tpu_custom_call.1} parent=5 // pred_check
        _
      $region38: #{tpu_custom_call.1} parent=5 // pred_check_branch
        %228 = sbr.rel (%p225) target = $region40
      $region39: #{tpu_custom_call.1} parent=5 // pred_region
        %s229 = ssub.s32 %s18, 1
        %s230 = sand.u32 %s31, 1
        %s231 = scalar_lea.sflag [#allocation3], %s230
        %s232 = sand.u32 %s31, 1
        %s233 = smul.addr %s232, 8
        %s234 = scalar_lea.vmem [#allocation2], %s233
        // Predicated region
        $region41: #{tpu_custom_call.1} parent=39 // pred_check
          %p235 = pneg %p44
        $region42: #{tpu_custom_call.1} parent=39 // pred_check_branch
          %237 = sbr.rel (%p235) target = $region44
        $region43: #{tpu_custom_call.1} parent=39 // pred_region
          %238 = dma.done %s231, 128
        $region44: #{tpu_custom_call.1} parent=39 // pred_fallthru
          _
        // Predicated region
        $region45: #{tpu_custom_call.1} parent=39 // pred_check
          %p239 = pneg %p65
        $region46: #{tpu_custom_call.1} parent=39 // pred_check_branch
          %241 = sbr.rel (%p239) target = $region48
        $region47: #{tpu_custom_call.1} parent=39 // pred_region
          %242 = dma.done [#allocation6], 1024
        $region48: #{tpu_custom_call.1} parent=39 // pred_fallthru
          _
        // Predicated region
        $region49: #{tpu_custom_call.1} parent=39 // pred_check
          %p243 = pneg %p107
        $region50: #{tpu_custom_call.1} parent=39 // pred_check_branch
          %245 = sbr.rel (%p243) target = $region52
        $region51: #{tpu_custom_call.1} parent=39 // pred_region
          %246 = dma.done [#allocation6], 1024
        $region52: #{tpu_custom_call.1} parent=39 // pred_fallthru
          _
        %s247 = sand.u32 %s31, 1
        %s248 = scalar_lea.sflag [#allocation3], %s247
        %s249 = sand.u32 %s31, 1
        %s250 = smul.addr %s249, 8
        %s251 = scalar_lea.vmem [#allocation2], %s250
        %p252 = pneg %p44
        %p253 = pneg %p41
        %p254 = pneg %p65
        %p255 = pneg %p62
        %p256 = pneg %p86
        %p257 = pneg %p83
        %p258 = pneg %p107
        %p259 = pneg %p104
        %p260 = pneg %p128
        %p261 = pneg %p125
        %p262 = pneg %p154
        %p263 = pneg %p151
        %s264 = sand.u32 %s141, 1
        %s265 = scalar_lea.sflag [#allocation4], %s264
        %s266 = sand.u32 %s141, 1
        %s267 = smul.addr %s266, 8
        %s268 = scalar_lea.vmem [#allocation8], %s267
        %v273 = vld [vmem:[%s234] sm:$0xff]
        %v274 = vpack.c.bf16 %v273, %v273
        %v275 = vld [vmem:[#allocation5] sm:$0xf]
        %v276 = vld [vmem:[#allocation5 + $0x4] sm:$0xf]
        %v277 = vld [vmem:[#allocation5 + $0x8] sm:$0xf]
        %v278 = vld [vmem:[#allocation5 + $0xc] sm:$0xf]
        %v279 = vld [vmem:[#allocation5 + $0x10] sm:$0xf]
        %v280 = vld [vmem:[#allocation5 + $0x14] sm:$0xf]
        %v281 = vld [vmem:[#allocation5 + $0x18] sm:$0xf]
        %v282 = vld [vmem:[#allocation5 + $0x1c] sm:$0xf]
        %v283 = vld [vmem:[#allocation5 + $0x20] sm:$0xf]
        %v284 = vld [vmem:[#allocation5 + $0x24] sm:$0xf]
        %v285 = vld [vmem:[#allocation5 + $0x28] sm:$0xf]
        %v286 = vld [vmem:[#allocation5 + $0x2c] sm:$0xf]
        %v287 = vld [vmem:[#allocation5 + $0x30] sm:$0xf]
        %v288 = vld [vmem:[#allocation5 + $0x34] sm:$0xf]
        %v289 = vld [vmem:[#allocation5 + $0x38] sm:$0xf]
        %v290 = vld [vmem:[#allocation5 + $0x3c] sm:$0xf]
        %v307 = vunpack.c.l.b16 %v275
        %v308 = vunpack.c.l.b16 %v276
        %v309 = vunpack.c.l.b16 %v277
        %v310 = vunpack.c.l.b16 %v278
        %v311 = vunpack.c.l.b16 %v279
        %v312 = vunpack.c.l.b16 %v280
        %v313 = vunpack.c.l.b16 %v281
        %v314 = vunpack.c.l.b16 %v282
        %v315 = vunpack.c.l.b16 %v283
        %v316 = vunpack.c.l.b16 %v284
        %v317 = vunpack.c.l.b16 %v285
        %v318 = vunpack.c.l.b16 %v286
        %v319 = vunpack.c.l.b16 %v287
        %v320 = vunpack.c.l.b16 %v288
        %v321 = vunpack.c.l.b16 %v289
        %v322 = vunpack.c.l.b16 %v290
        %v323 = vpack.c.b16 %v308, %v307
        %v324 = vpack.c.b16 %v310, %v309
        %v325 = vpack.c.b16 %v312, %v311
        %v326 = vpack.c.b16 %v314, %v313
        %v327 = vpack.c.b16 %v316, %v315
        %v328 = vpack.c.b16 %v318, %v317
        %v329 = vpack.c.b16 %v320, %v319
        %v330 = vpack.c.b16 %v322, %v321
        %339 = vmatprep.subr.bf16.mxu0 0
        %340 = vmatpush1.bf16.msra.mxu0 %v330
        %341 = vmatprep.subr.bf16.mxu0 0
        %342 = vmatpush1.bf16.msra.mxu0 %v329
        %343 = vmatprep.subr.bf16.mxu0 0
        %344 = vmatpush1.bf16.msra.mxu0 %v328
        %345 = vmatprep.subr.bf16.mxu0 0
        %346 = vmatpush1.bf16.msra.mxu0 %v327
        %347 = vmatprep.subr.bf16.mxu0 0
        %348 = vmatpush1.bf16.msra.mxu0 %v326
        %349 = vmatprep.subr.bf16.mxu0 0
        %350 = vmatpush1.bf16.msra.mxu0 %v325
        %351 = vmatprep.subr.bf16.mxu0 0
        %352 = vmatpush1.bf16.msra.mxu0 %v324
        %353 = vmatprep.subr.bf16.mxu0 0
        %354 = vmatpush1.bf16.msra.mxu0 %v323
        %355 = vmatprep.subr.bf16.mxu0 0
        %356 = vmatpush2.bf16.msra.mxu0 0
        %357 = vmatprep.subr.bf16.mxu0 0
        %358 = vmatpush2.bf16.msra.mxu0 0
        %359 = vmatprep.subr.bf16.mxu0 0
        %360 = vmatpush2.bf16.msra.mxu0 0
        %361 = vmatprep.subr.bf16.mxu0 0
        %362 = vmatpush2.bf16.msra.mxu0 0
        %363 = vmatprep.subr.bf16.mxu0 0
        %364 = vmatpush2.bf16.msra.mxu0 0
        %365 = vmatprep.subr.bf16.mxu0 0
        %366 = vmatpush2.bf16.msra.mxu0 0
        %367 = vmatprep.subr.bf16.mxu0 0
        %368 = vmatpush2.bf16.msra.mxu0 0
        %369 = vmatprep.subr.bf16.mxu0 0
        %370 = vmatpush2.bf16.msra.mxu0 0
        %371 = vmatprep.mubr.bf16.mxu0 0
        %372 = vmatmul.mubr.bf16.gmra.mxu0 %v274
        %v373 = vpop.f32.mrf.mxu0
        %v374 = vadd.f32 0.0, %v373
        %v375 = vpop.f32.mrf.mxu0
        %v376 = vpop.f32.mrf.mxu0
        %v377 = vpop.f32.mrf.mxu0
        %378 = vdwg.mxu0
        %v379 = vpack.c.bf16 %v374, %v374
        %v380 = vld [vmem:[%s2] sm:$0x1]
        %v381 = vpack.c.bf16 %v380, %v380
        %v383 = vpack.i.b16 %v381, %v381
        %v385 = vlaneseq
        %v386 = vshrl.u32 %v385, 7
        %v387 = vsub.s32 0, %v386
        %v388 = vrot.slane %v383, %v387
        %v389 = vadd.bf16 %v379, %v388
        %v390 = vmul.bf16 %v389, 1056980736
        %v391 = vmul.bf16 %v389, 1060454197
        %v392 = verf.bf16.pop %v391
        %v393 = vadd.bf16 %v392, 1065369472
        %v394 = vmul.bf16 %v390, %v393
        %v395 = vld [vmem:[#allocation7] sm:$0xf]
        %v396 = vld [vmem:[#allocation7 + $0x4] sm:$0xf]
        %v397 = vld [vmem:[#allocation7 + $0x8] sm:$0xf]
        %v398 = vld [vmem:[#allocation7 + $0xc] sm:$0xf]
        %v399 = vld [vmem:[#allocation7 + $0x10] sm:$0xf]
        %v400 = vld [vmem:[#allocation7 + $0x14] sm:$0xf]
        %v401 = vld [vmem:[#allocation7 + $0x18] sm:$0xf]
        %v402 = vld [vmem:[#allocation7 + $0x1c] sm:$0xf]
        %v403 = vld [vmem:[#allocation7 + $0x20] sm:$0xf]
        %v404 = vld [vmem:[#allocation7 + $0x24] sm:$0xf]
        %v405 = vld [vmem:[#allocation7 + $0x28] sm:$0xf]
        %v406 = vld [vmem:[#allocation7 + $0x2c] sm:$0xf]
        %v407 = vld [vmem:[#allocation7 + $0x30] sm:$0xf]
        %v408 = vld [vmem:[#allocation7 + $0x34] sm:$0xf]
        %v409 = vld [vmem:[#allocation7 + $0x38] sm:$0xf]
        %v410 = vld [vmem:[#allocation7 + $0x3c] sm:$0xf]
        %v411 = vld [vmem:[%s4] sm:$0x1]
        %v413 = vlaneseq
        %v414 = vshrl.u32 %v413, 7
        %v415 = vsub.s32 0, %v414
        %v416 = vrot.slane %v411, %v415
        %v434 = vunpack.c.l.b16 %v395
        %v435 = vunpack.c.l.b16 %v396
        %v436 = vunpack.c.l.b16 %v397
        %v437 = vunpack.c.l.b16 %v398
        %v438 = vunpack.c.l.b16 %v399
        %v439 = vunpack.c.l.b16 %v400
        %v440 = vunpack.c.l.b16 %v401
        %v441 = vunpack.c.l.b16 %v402
        %v442 = vunpack.c.l.b16 %v403
        %v443 = vunpack.c.l.b16 %v404
        %v444 = vunpack.c.l.b16 %v405
        %v445 = vunpack.c.l.b16 %v406
        %v446 = vunpack.c.l.b16 %v407
        %v447 = vunpack.c.l.b16 %v408
        %v448 = vunpack.c.l.b16 %v409
        %v449 = vunpack.c.l.b16 %v410
        %v450 = vpack.c.b16 %v435, %v434
        %v451 = vpack.c.b16 %v437, %v436
        %v452 = vpack.c.b16 %v439, %v438
        %v453 = vpack.c.b16 %v441, %v440
        %v454 = vpack.c.b16 %v443, %v442
        %v455 = vpack.c.b16 %v445, %v444
        %v456 = vpack.c.b16 %v447, %v446
        %v457 = vpack.c.b16 %v449, %v448
        %466 = vmatprep.subr.bf16.mxu0 0
        %467 = vmatpush1.bf16.msra.mxu0 %v457
        %468 = vmatprep.subr.bf16.mxu0 0
        %469 = vmatpush1.bf16.msra.mxu0 %v456
        %470 = vmatprep.subr.bf16.mxu0 0
        %471 = vmatpush1.bf16.msra.mxu0 %v455
        %472 = vmatprep.subr.bf16.mxu0 0
        %473 = vmatpush1.bf16.msra.mxu0 %v454
        %474 = vmatprep.subr.bf16.mxu0 0
        %475 = vmatpush1.bf16.msra.mxu0 %v453
        %476 = vmatprep.subr.bf16.mxu0 0
        %477 = vmatpush1.bf16.msra.mxu0 %v452
        %478 = vmatprep.subr.bf16.mxu0 0
        %479 = vmatpush1.bf16.msra.mxu0 %v451
        %480 = vmatprep.subr.bf16.mxu0 0
        %481 = vmatpush1.bf16.msra.mxu0 %v450
        %482 = vmatprep.subr.bf16.mxu0 0
        %483 = vmatpush2.bf16.msra.mxu0 0
        %484 = vmatprep.subr.bf16.mxu0 0
        %485 = vmatpush2.bf16.msra.mxu0 0
        %486 = vmatprep.subr.bf16.mxu0 0
        %487 = vmatpush2.bf16.msra.mxu0 0
        %488 = vmatprep.subr.bf16.mxu0 0
        %489 = vmatpush2.bf16.msra.mxu0 0
        %490 = vmatprep.subr.bf16.mxu0 0
        %491 = vmatpush2.bf16.msra.mxu0 0
        %492 = vmatprep.subr.bf16.mxu0 0
        %493 = vmatpush2.bf16.msra.mxu0 0
        %494 = vmatprep.subr.bf16.mxu0 0
        %495 = vmatpush2.bf16.msra.mxu0 0
        %496 = vmatprep.subr.bf16.mxu0 0
        %497 = vmatpush2.bf16.msra.mxu0 0
        %498 = vmatprep.mubr.bf16.mxu0 0
        %499 = vmatmul.mubr.bf16.gmra.mxu0 %v394
        %v500 = vpop.f32.mrf.mxu0
        %v501 = vadd.f32 %v416, %v500
        %v502 = vpop.f32.mrf.mxu0
        %v503 = vpop.f32.mrf.mxu0
        %v504 = vpop.f32.mrf.mxu0
        %505 = vdwg.mxu0
        %506 = vst [vmem:[%s268] sm:$0xff] %v501
        %s507 = sand.u32 %s141, 1
        %s508 = scalar_lea.sflag [#allocation4], %s507
        %s509 = sand.u32 %s141, 1
        %s510 = smul.addr %s509, 8
        %s511 = scalar_lea.vmem [#allocation8], %s510
        // Predicated region
        $region53: #{tpu_custom_call.1} parent=39 // pred_check
          %p512 = pneg %p151
        $region54: #{tpu_custom_call.1} parent=39 // pred_check_branch
          %514 = sbr.rel (%p512) target = $region56
        $region55: #{tpu_custom_call.1} parent=39 // pred_region
          %s516 = ssub.s32 128, 128
          %517 = vsyncadd %s508, %s516
          %s518 = smul.addr %s23, 128
          %s519 = scalar_lea.hbm %s5, %s518
          %s521 = sshll.u32 %s511, 4
          %s522 = int_to_ptr.vmem [resolvable:$true] %s521
          %524 = dma.vmem_to_hbm [thread:$0]  %s522, 128, %s519, %s508
        $region56: #{tpu_custom_call.1} parent=39 // pred_fallthru
          _
      $region40: #{tpu_custom_call.1} parent=5 // pred_fallthru
        _
      %p525 = scmp.le.s32.totalorder 2, %s18
      // Predicated region
      $region57: #{tpu_custom_call.1} parent=5 // pred_check
        %p526 = pneg %p525
      $region58: #{tpu_custom_call.1} parent=5 // pred_check_branch
        %528 = sbr.rel (%p526) target = $region60
      $region59: #{tpu_custom_call.1} parent=5 // pred_region
        %s529 = ssub.s32 %s18, 2
        // Predicated region
        $region61: #{tpu_custom_call.1} parent=59 // pred_check
          %p530 = pneg %p157
        $region62: #{tpu_custom_call.1} parent=59 // pred_check_branch
          %532 = sbr.rel (%p530) target = $region64
        $region63: #{tpu_custom_call.1} parent=59 // pred_region
          %s533 = sand.u32 %s142, 1
          %s534 = scalar_lea.sflag [#allocation4], %s533
          %s535 = sand.u32 %s142, 1
          %s536 = smul.addr %s535, 8
          %s537 = scalar_lea.vmem [#allocation8], %s536
          %538 = dma.done %s534, 128
        $region64: #{tpu_custom_call.1} parent=59 // pred_fallthru
          _
      $region60: #{tpu_custom_call.1} parent=5 // pred_fallthru
        _
    $region6: #{tpu_custom_call.1} parent=1 // loop_footer
      %s22 = sadd.s32 1, %s18
    $region7: #{tpu_custom_call.1} parent=1 // loop_footer_branch
      %17 = sbr.rel target = $region3
    $region8: #{tpu_custom_call.1} parent=1 // loop_exit
      _
    %539 = vsyncpa [#allocation3], 1
    %s540 = scalar_lea.sflag [#allocation3], 1
    %541 = vsyncpa %s540, 1
    %542 = vsyncpa [#allocation6], 1
    %543 = vsyncpa [#allocation4], 1
    %s544 = scalar_lea.sflag [#allocation4], 1
    %545 = vsyncpa %s544, 1

// kernel: tpu_custom_call.1
$region0: #{tpu_custom_call.1}
  #allocation0 [shape = 'u32[]', space=smem, size = 0x4, offset = 0x4, fixed_abs, tag = 'smem constant byte address 0x4 - core index']
  #allocation1 [shape = 'u32[144,128]{1,0:T(1,128)}', space=vmem, size = 0x12000, scoped, tag = 'internal scratch']
  %s0 = inlined_call_operand.hbm [shape: f32[16,128], index: 0, kind: input, shape index: {}]
  %s1 = inlined_call_operand.hbm [shape: bf16[128,128], index: 1, kind: input, shape index: {}]
  %s2 = inlined_call_operand.vmem [shape: f32[1,128], index: 2, kind: input, shape index: {}]
  %s3 = inlined_call_operand.hbm [shape: bf16[128,128], index: 3, kind: input, shape index: {}]
  %s4 = inlined_call_operand.vmem [shape: f32[1,128], index: 4, kind: input, shape index: {}]
  %s5 = inlined_call_operand.hbm [shape: f32[16,128], index: 5, kind: output, shape index: {}]
  %s6 = sld [smem:[#allocation0]]
  $region65: #{tpu_custom_call.1} parent=0
    _
  %s8 = ssub.s32 1, %s6
  %s9 = scalar_select 0, %s8, %s6
  $region1: #{tpu_custom_call.1} parent=0
    #allocation2 [shape = 'u8[8192]{0}', space=vmem, size = 0x2000, scoped, tag = 'input window, operand 0']
    #allocation3 [shape = 's32[2]{0}', space=sflag, size = 0x8, scoped, tag = 'scoped memory for tpu_custom_call.1']
    #allocation4 [shape = 's32[2]{0}', space=sflag, size = 0x8, scoped, tag = 'scoped memory for tpu_custom_call.1']
    #allocation5 [shape = 'u8[32768]{0}', space=vmem, size = 0x8000, scoped, tag = 'input window, operand 1, single buffered']
    #allocation6 [shape = 's32[1]{0}', space=sflag, size = 0x4, scoped, tag = 'scoped memory for tpu_custom_call.1']
    #allocation7 [shape = 'u8[32768]{0}', space=vmem, size = 0x8000, scoped, tag = 'input window, operand 3, single buffered']
    #allocation8 [shape = 'u8[8192]{0}', space=vmem, size = 0x2000, scoped, tag = 'output window, operand 0']
    %10 = vsyncpa [#allocation3], 0
    %s11 = scalar_lea.sflag [#allocation3], 1
    %12 = vsyncpa %s11, 0
    %13 = vsyncpa [#allocation6], 0
    %14 = vsyncpa [#allocation4], 0
    %s15 = scalar_lea.sflag [#allocation4], 1
    %16 = vsyncpa %s15, 0
    loop: start=0, step=1, limit=4
    $region2: #{tpu_custom_call.1} parent=1 // loop_pre_header
      _
    $region3: #{tpu_custom_call.1} parent=1 // loop_header
      %s18 = sphi 0, %s22
      %p19 = scmp.ge.s32.totalorder %s18, 4
      %s28 = sphi 0, %s30
      %s31 = sphi 0, %s28
      %s32 = sphi 0, %s31
      %s48 = sphi 0, %s32
      %s52 = sphi 0, %s52
      %s54 = sphi 0, %s52
      %s55 = sphi 0, %s54
      %s69 = sphi 0, %s55
      %s73 = sphi 0, %s73
      %s75 = sphi 0, %s73
      %s76 = sphi 0, %s75
      %s90 = sphi 0, %s76
      %s94 = sphi 0, %s94
      %s96 = sphi 0, %s94
      %s97 = sphi 0, %s96
      %s111 = sphi 0, %s97
      %s115 = sphi 0, %s115
      %s117 = sphi 0, %s115
      %s118 = sphi 0, %s117
      %s132 = sphi 0, %s118
      %s138 = sphi 0, %s140
      %s141 = sphi 0, %s138
      %s142 = sphi 0, %s141
      %s158 = sphi 0, %s142
    $region4: #{tpu_custom_call.1} parent=1 // loop_header_branch
      %21 = sbr.rel (%p19) target = $region8
    $region5: #{tpu_custom_call.1} parent=1 // loop_body
      %s23 = ssub.s32 %s18, 1
      %s24 = ssub.s32 %s18, 2
      %s25 = sadd.s32 %s18, 1
      %s26 = ssub.s32 %s18, %s25
      %p27 = scmp.eq.s32.totalorder %s26, 0
      %s29 = sadd.s32 %s28, 1
      %s30 = scalar_select %p27, %s28, %s29
      %p33 = pneg %p27
      %p34 = scmp.eq.s32.totalorder %s18, 1
      %p35 = por %p33, %p34
      %p36 = scmp.ne.s32.totalorder %s28, %s31
      %p37 = scmp.eq.s32.totalorder %s18, 0
      %p38 = por %p36, %p37
      %p39 = scmp.ne.s32.totalorder %s28, %s31
      %p40 = scmp.eq.s32.totalorder %s23, 1
      %p41 = por %p39, %p40
      %p42 = scmp.ne.s32.totalorder %s31, %s32
      %p43 = scmp.eq.s32.totalorder %s23, 0
      %p44 = por %p42, %p43
      %p45 = scmp.ne.s32.totalorder %s31, %s32
      %p46 = scmp.eq.s32.totalorder %s24, 1
      %p47 = por %p45, %p46
      %p49 = scmp.ne.s32.totalorder %s32, %s48
      %p50 = scmp.eq.s32.totalorder %s24, 0
      %p51 = por %p49, %p50
      %s53 = sadd.s32 %s52, 1
      %p56 = scmp.eq.s32.totalorder %s18, 1
      %p57 = scmp.ne.s32.totalorder %s52, %s54
      %p58 = scmp.eq.s32.totalorder %s18, 0
      %p59 = por %p57, %p58
      %p60 = scmp.ne.s32.totalorder %s52, %s54
      %p61 = scmp.eq.s32.totalorder %s23, 1
      %p62 = por %p60, %p61
      %p63 = scmp.ne.s32.totalorder %s54, %s55
      %p64 = scmp.eq.s32.totalorder %s23, 0
      %p65 = por %p63, %p64
      %p66 = scmp.ne.s32.totalorder %s54, %s55
      %p67 = scmp.eq.s32.totalorder %s24, 1
      %p68 = por %p66, %p67
      %p70 = scmp.ne.s32.totalorder %s55, %s69
      %p71 = scmp.eq.s32.totalorder %s24, 0
      %p72 = por %p70, %p71
      %s74 = sadd.s32 %s73, 1
      %p77 = scmp.eq.s32.totalorder %s18, 1
      %p78 = scmp.ne.s32.totalorder %s73, %s75
      %p79 = scmp.eq.s32.totalorder %s18, 0
      %p80 = por %p78, %p79
      %p81 = scmp.ne.s32.totalorder %s73, %s75
      %p82 = scmp.eq.s32.totalorder %s23, 1
      %p83 = por %p81, %p82
      %p84 = scmp.ne.s32.totalorder %s75, %s76
      %p85 = scmp.eq.s32.totalorder %s23, 0
      %p86 = por %p84, %p85
      %p87 = scmp.ne.s32.totalorder %s75, %s76
      %p88 = scmp.eq.s32.totalorder %s24, 1
      %p89 = por %p87, %p88
      %p91 = scmp.ne.s32.totalorder %s76, %s90
      %p92 = scmp.eq.s32.totalorder %s24, 0
      %p93 = por %p91, %p92
      %s95 = sadd.s32 %s94, 1
      %p98 = scmp.eq.s32.totalorder %s18, 1
      %p99 = scmp.ne.s32.totalorder %s94, %s96
      %p100 = scmp.eq.s32.totalorder %s18, 0
      %p101 = por %p99, %p100
      %p102 = scmp.ne.s32.totalorder %s94, %s96
      %p103 = scmp.eq.s32.totalorder %s23, 1
      %p104 = por %p102, %p103
      %p105 = scmp.ne.s32.totalorder %s96, %s97
      %p106 = scmp.eq.s32.totalorder %s23, 0
      %p107 = por %p105, %p106
      %p108 = scmp.ne.s32.totalorder %s96, %s97
      %p109 = scmp.eq.s32.totalorder %s24, 1
      %p110 = por %p108, %p109
      %p112 = scmp.ne.s32.totalorder %s97, %s111
      %p113 = scmp.eq.s32.totalorder %s24, 0
      %p114 = por %p112, %p113
      %s116 = sadd.s32 %s115, 1
      %p119 = scmp.eq.s32.totalorder %s18, 1
      %p120 = scmp.ne.s32.totalorder %s115, %s117
      %p121 = scmp.eq.s32.totalorder %s18, 0
      %p122 = por %p120, %p121
      %p123 = scmp.ne.s32.totalorder %s115, %s117
      %p124 = scmp.eq.s32.totalorder %s23, 1
      %p125 = por %p123, %p124
      %p126 = scmp.ne.s32.totalorder %s117, %s118
      %p127 = scmp.eq.s32.totalorder %s23, 0
      %p128 = por %p126, %p127
      %p129 = scmp.ne.s32.totalorder %s117, %s118
      %p130 = scmp.eq.s32.totalorder %s24, 1
      %p131 = por %p129, %p130
      %p133 = scmp.ne.s32.totalorder %s118, %s132
      %p134 = scmp.eq.s32.totalorder %s24, 0
      %p135 = por %p133, %p134
      %s136 = ssub.s32 %s18, %s25
      %p137 = scmp.eq.s32.totalorder %s136, 0
      %s139 = sadd.s32 %s138, 1
      %s140 = scalar_select %p137, %s138, %s139
      %p143 = pneg %p137
      %p144 = scmp.eq.s32.totalorder %s18, 1
      %p145 = por %p143, %p144
      %p146 = scmp.ne.s32.totalorder %s138, %s141
      %p147 = scmp.eq.s32.totalorder %s18, 0
      %p148 = por %p146, %p147
      %p149 = scmp.ne.s32.totalorder %s138, %s141
      %p150 = scmp.eq.s32.totalorder %s23, 1
      %p151 = por %p149, %p150
      %p152 = scmp.ne.s32.totalorder %s141, %s142
      %p153 = scmp.eq.s32.totalorder %s23, 0
      %p154 = por %p152, %p153
      %p155 = scmp.ne.s32.totalorder %s141, %s142
      %p156 = scmp.eq.s32.totalorder %s24, 1
      %p157 = por %p155, %p156
      %p159 = scmp.ne.s32.totalorder %s142, %s158
      %p160 = scmp.eq.s32.totalorder %s24, 0
      %p161 = por %p159, %p160
      %p162 = scmp.le.s32.totalorder 1, %s18
      %p163 = scmp.lt.s32.totalorder %s18, 3
      %p164 = pnand %p162, %p163
      %p165 = pneg %p164
      // Predicated region
      $region9: #{tpu_custom_call.1} parent=5 // pred_check
        _
      $region10: #{tpu_custom_call.1} parent=5 // pred_check_branch
        %167 = sbr.rel (%p164) target = $region12
      $region11: #{tpu_custom_call.1} parent=5 // pred_region
        %s168 = ssub.s32 %s18, 1
        // Predicated region
        $region13: #{tpu_custom_call.1} parent=11 // pred_check
          %p169 = pneg %p65
        $region14: #{tpu_custom_call.1} parent=11 // pred_check_branch
          %171 = sbr.rel (%p169) target = $region16
        $region15: #{tpu_custom_call.1} parent=11 // pred_region
          %s173 = ssub.s32 1024, 1024
          %174 = vsyncadd [#allocation6], %s173
          %s175 = sshll.u32 [#allocation5], 4
          %s176 = int_to_ptr.vmem [resolvable:$true] %s175
          %181 = dma.hbm_to_vmem [thread:$0]  %s1, 1024, %s176, [#allocation6], 64, 64, 4
        $region16: #{tpu_custom_call.1} parent=11 // pred_fallthru
          _
        // Predicated region
        $region17: #{tpu_custom_call.1} parent=11 // pred_check
          %p182 = pneg %p86
        $region18: #{tpu_custom_call.1} parent=11 // pred_check_branch
          %184 = sbr.rel (%p182) target = $region20
        $region19: #{tpu_custom_call.1} parent=11 // pred_region
          _
        $region20: #{tpu_custom_call.1} parent=11 // pred_fallthru
          _
        // Predicated region
        $region21: #{tpu_custom_call.1} parent=11 // pred_check
          %p185 = pneg %p107
        $region22: #{tpu_custom_call.1} parent=11 // pred_check_branch
          %187 = sbr.rel (%p185) target = $region24
        $region23: #{tpu_custom_call.1} parent=11 // pred_region
          %s189 = ssub.s32 1024, 1024
          %190 = vsyncadd [#allocation6], %s189
          %s191 = sshll.u32 [#allocation7], 4
          %s192 = int_to_ptr.vmem [resolvable:$true] %s191
          %197 = dma.hbm_to_vmem [thread:$0]  %s3, 1024, %s192, [#allocation6], 64, 64, 4
        $region24: #{tpu_custom_call.1} parent=11 // pred_fallthru
          _
        // Predicated region
        $region25: #{tpu_custom_call.1} parent=11 // pred_check
          %p198 = pneg %p128
        $region26: #{tpu_custom_call.1} parent=11 // pred_check_branch
          %200 = sbr.rel (%p198) target = $region28
        $region27: #{tpu_custom_call.1} parent=11 // pred_region
          _
        $region28: #{tpu_custom_call.1} parent=11 // pred_fallthru
          _
      $region12: #{tpu_custom_call.1} parent=5 // pred_fallthru
        _
      %p201 = scmp.lt.s32.totalorder %s18, 2
      // Predicated region
      $region29: #{tpu_custom_call.1} parent=5 // pred_check
        %p202 = pneg %p201
      $region30: #{tpu_custom_call.1} parent=5 // pred_check_branch
        %204 = sbr.rel (%p202) target = $region32
      $region31: #{tpu_custom_call.1} parent=5 // pred_region
        // Predicated region
        $region33: #{tpu_custom_call.1} parent=31 // pred_check
          %p205 = pneg %p38
        $region34: #{tpu_custom_call.1} parent=31 // pred_check_branch
          %207 = sbr.rel (%p205) target = $region36
        $region35: #{tpu_custom_call.1} parent=31 // pred_region
          %s208 = sand.u32 %s28, 1
          %s209 = scalar_lea.sflag [#allocation3], %s208
          %s210 = sand.u32 %s28, 1
          %s211 = smul.addr %s210, 8
          %s212 = scalar_lea.vmem [#allocation2], %s211
          %s214 = ssub.s32 128, 128
          %215 = vsyncadd %s209, %s214
          %s216 = smul.addr %s18, 128
          %s217 = scalar_lea.hbm %s0, %s216
          %s219 = sshll.u32 %s212, 4
          %s220 = int_to_ptr.vmem [resolvable:$true] %s219
          %222 = dma.hbm_to_vmem [thread:$0]  %s217, 128, %s220, %s209
        $region36: #{tpu_custom_call.1} parent=31 // pred_fallthru
          _
      $region32: #{tpu_custom_call.1} parent=5 // pred_fallthru
        _
      %p223 = scmp.le.s32.totalorder 1, %s18
      %p224 = scmp.lt.s32.totalorder %s18, 3
      %p225 = pnand %p223, %p224
      %p226 = pneg %p225
      // Predicated region
      $region37: #{tpu_custom_call.1} parent=5 // pred_check
        _
      $region38: #{tpu_custom_call.1} parent=5 // pred_check_branch
        %228 = sbr.rel (%p225) target = $region40
      $region39: #{tpu_custom_call.1} parent=5 // pred_region
        %s229 = ssub.s32 %s18, 1
        %s230 = sand.u32 %s31, 1
        %s231 = scalar_lea.sflag [#allocation3], %s230
        %s232 = sand.u32 %s31, 1
        %s233 = smul.addr %s232, 8
        %s234 = scalar_lea.vmem [#allocation2], %s233
        // Predicated region
        $region41: #{tpu_custom_call.1} parent=39 // pred_check
          %p235 = pneg %p44
        $region42: #{tpu_custom_call.1} parent=39 // pred_check_branch
          %237 = sbr.rel (%p235) target = $region44
        $region43: #{tpu_custom_call.1} parent=39 // pred_region
          %238 = dma.done %s231, 128
        $region44: #{tpu_custom_call.1} parent=39 // pred_fallthru
          _
        // Predicated region
        $region45: #{tpu_custom_call.1} parent=39 // pred_check
          %p239 = pneg %p65
        $region46: #{tpu_custom_call.1} parent=39 // pred_check_branch
          %241 = sbr.rel (%p239) target = $region48
        $region47: #{tpu_custom_call.1} parent=39 // pred_region
          %242 = dma.done [#allocation6], 1024
        $region48: #{tpu_custom_call.1} parent=39 // pred_fallthru
          _
        // Predicated region
        $region49: #{tpu_custom_call.1} parent=39 // pred_check
          %p243 = pneg %p107
        $region50: #{tpu_custom_call.1} parent=39 // pred_check_branch
          %245 = sbr.rel (%p243) target = $region52
        $region51: #{tpu_custom_call.1} parent=39 // pred_region
          %246 = dma.done [#allocation6], 1024
        $region52: #{tpu_custom_call.1} parent=39 // pred_fallthru
          _
        %s247 = sand.u32 %s31, 1
        %s248 = scalar_lea.sflag [#allocation3], %s247
        %s249 = sand.u32 %s31, 1
        %s250 = smul.addr %s249, 8
        %s251 = scalar_lea.vmem [#allocation2], %s250
        %p252 = pneg %p44
        %p253 = pneg %p41
        %p254 = pneg %p65
        %p255 = pneg %p62
        %p256 = pneg %p86
        %p257 = pneg %p83
        %p258 = pneg %p107
        %p259 = pneg %p104
        %p260 = pneg %p128
        %p261 = pneg %p125
        %p262 = pneg %p154
        %p263 = pneg %p151
        %s264 = sand.u32 %s141, 1
        %s265 = scalar_lea.sflag [#allocation4], %s264
        %s266 = sand.u32 %s141, 1
        %s267 = smul.addr %s266, 8
        %s268 = scalar_lea.vmem [#allocation8], %s267
        %v270 = vld [vmem:[%s234] sm:$0xff]
        %v271 = vpack.c.bf16 %v270, %v270
        %v272 = vld [vmem:[#allocation5] sm:$0xf]
        %v273 = vld [vmem:[#allocation5 + $0x4] sm:$0xf]
        %v274 = vld [vmem:[#allocation5 + $0x8] sm:$0xf]
        %v275 = vld [vmem:[#allocation5 + $0xc] sm:$0xf]
        %v276 = vld [vmem:[#allocation5 + $0x10] sm:$0xf]
        %v277 = vld [vmem:[#allocation5 + $0x14] sm:$0xf]
        %v278 = vld [vmem:[#allocation5 + $0x18] sm:$0xf]
        %v279 = vld [vmem:[#allocation5 + $0x1c] sm:$0xf]
        %v280 = vld [vmem:[#allocation5 + $0x20] sm:$0xf]
        %v281 = vld [vmem:[#allocation5 + $0x24] sm:$0xf]
        %v282 = vld [vmem:[#allocation5 + $0x28] sm:$0xf]
        %v283 = vld [vmem:[#allocation5 + $0x2c] sm:$0xf]
        %v284 = vld [vmem:[#allocation5 + $0x30] sm:$0xf]
        %v285 = vld [vmem:[#allocation5 + $0x34] sm:$0xf]
        %v286 = vld [vmem:[#allocation5 + $0x38] sm:$0xf]
        %v287 = vld [vmem:[#allocation5 + $0x3c] sm:$0xf]
        %v288 = vld [vmem:[%s2] sm:$0x1]
        %v290 = vlaneseq
        %v291 = vshrl.u32 %v290, 7
        %v292 = vsub.s32 0, %v291
        %v293 = vrot.slane %v288, %v292
        %v311 = vunpack.c.l.b16 %v272
        %v312 = vunpack.c.l.b16 %v273
        %v313 = vunpack.c.l.b16 %v274
        %v314 = vunpack.c.l.b16 %v275
        %v315 = vunpack.c.l.b16 %v276
        %v316 = vunpack.c.l.b16 %v277
        %v317 = vunpack.c.l.b16 %v278
        %v318 = vunpack.c.l.b16 %v279
        %v319 = vunpack.c.l.b16 %v280
        %v320 = vunpack.c.l.b16 %v281
        %v321 = vunpack.c.l.b16 %v282
        %v322 = vunpack.c.l.b16 %v283
        %v323 = vunpack.c.l.b16 %v284
        %v324 = vunpack.c.l.b16 %v285
        %v325 = vunpack.c.l.b16 %v286
        %v326 = vunpack.c.l.b16 %v287
        %v327 = vpack.c.b16 %v312, %v311
        %v328 = vpack.c.b16 %v314, %v313
        %v329 = vpack.c.b16 %v316, %v315
        %v330 = vpack.c.b16 %v318, %v317
        %v331 = vpack.c.b16 %v320, %v319
        %v332 = vpack.c.b16 %v322, %v321
        %v333 = vpack.c.b16 %v324, %v323
        %v334 = vpack.c.b16 %v326, %v325
        %343 = vmatprep.subr.bf16.mxu0 0
        %344 = vmatpush1.bf16.msra.mxu0 %v334
        %345 = vmatprep.subr.bf16.mxu0 0
        %346 = vmatpush1.bf16.msra.mxu0 %v333
        %347 = vmatprep.subr.bf16.mxu0 0
        %348 = vmatpush1.bf16.msra.mxu0 %v332
        %349 = vmatprep.subr.bf16.mxu0 0
        %350 = vmatpush1.bf16.msra.mxu0 %v331
        %351 = vmatprep.subr.bf16.mxu0 0
        %352 = vmatpush1.bf16.msra.mxu0 %v330
        %353 = vmatprep.subr.bf16.mxu0 0
        %354 = vmatpush1.bf16.msra.mxu0 %v329
        %355 = vmatprep.subr.bf16.mxu0 0
        %356 = vmatpush1.bf16.msra.mxu0 %v328
        %357 = vmatprep.subr.bf16.mxu0 0
        %358 = vmatpush1.bf16.msra.mxu0 %v327
        %359 = vmatprep.subr.bf16.mxu0 0
        %360 = vmatpush2.bf16.msra.mxu0 0
        %361 = vmatprep.subr.bf16.mxu0 0
        %362 = vmatpush2.bf16.msra.mxu0 0
        %363 = vmatprep.subr.bf16.mxu0 0
        %364 = vmatpush2.bf16.msra.mxu0 0
        %365 = vmatprep.subr.bf16.mxu0 0
        %366 = vmatpush2.bf16.msra.mxu0 0
        %367 = vmatprep.subr.bf16.mxu0 0
        %368 = vmatpush2.bf16.msra.mxu0 0
        %369 = vmatprep.subr.bf16.mxu0 0
        %370 = vmatpush2.bf16.msra.mxu0 0
        %371 = vmatprep.subr.bf16.mxu0 0
        %372 = vmatpush2.bf16.msra.mxu0 0
        %373 = vmatprep.subr.bf16.mxu0 0
        %374 = vmatpush2.bf16.msra.mxu0 0
        %375 = vmatprep.mubr.bf16.mxu0 0
        %376 = vmatmul.mubr.bf16.gmra.mxu0 %v271
        %v377 = vpop.f32.mrf.mxu0
        %v378 = vadd.f32 %v293, %v377
        %v379 = vpop.f32.mrf.mxu0
        %v380 = vpop.f32.mrf.mxu0
        %v381 = vpop.f32.mrf.mxu0
        %382 = vdwg.mxu0
        %v383 = vmul.f32 %v378, 0.5
        %v384 = vmul.f32 %v378, 0.70710677
        %v385 = verf.f32.pop %v384
        %v386 = vadd.f32 %v385, 1.0
        %v387 = vmul.f32 %v383, %v386
        %v388 = vpack.c.bf16 %v387, %v387
        %v389 = vld [vmem:[#allocation7] sm:$0xf]
        %v390 = vld [vmem:[#allocation7 + $0x4] sm:$0xf]
        %v391 = vld [vmem:[#allocation7 + $0x8] sm:$0xf]
        %v392 = vld [vmem:[#allocation7 + $0xc] sm:$0xf]
        %v393 = vld [vmem:[#allocation7 + $0x10] sm:$0xf]
        %v394 = vld [vmem:[#allocation7 + $0x14] sm:$0xf]
        %v395 = vld [vmem:[#allocation7 + $0x18] sm:$0xf]
        %v396 = vld [vmem:[#allocation7 + $0x1c] sm:$0xf]
        %v397 = vld [vmem:[#allocation7 + $0x20] sm:$0xf]
        %v398 = vld [vmem:[#allocation7 + $0x24] sm:$0xf]
        %v399 = vld [vmem:[#allocation7 + $0x28] sm:$0xf]
        %v400 = vld [vmem:[#allocation7 + $0x2c] sm:$0xf]
        %v401 = vld [vmem:[#allocation7 + $0x30] sm:$0xf]
        %v402 = vld [vmem:[#allocation7 + $0x34] sm:$0xf]
        %v403 = vld [vmem:[#allocation7 + $0x38] sm:$0xf]
        %v404 = vld [vmem:[#allocation7 + $0x3c] sm:$0xf]
        %v405 = vld [vmem:[%s4] sm:$0x1]
        %v407 = vlaneseq
        %v408 = vshrl.u32 %v407, 7
        %v409 = vsub.s32 0, %v408
        %v410 = vrot.slane %v405, %v409
        %v428 = vunpack.c.l.b16 %v389
        %v429 = vunpack.c.l.b16 %v390
        %v430 = vunpack.c.l.b16 %v391
        %v431 = vunpack.c.l.b16 %v392
        %v432 = vunpack.c.l.b16 %v393
        %v433 = vunpack.c.l.b16 %v394
        %v434 = vunpack.c.l.b16 %v395
        %v435 = vunpack.c.l.b16 %v396
        %v436 = vunpack.c.l.b16 %v397
        %v437 = vunpack.c.l.b16 %v398
        %v438 = vunpack.c.l.b16 %v399
        %v439 = vunpack.c.l.b16 %v400
        %v440 = vunpack.c.l.b16 %v401
        %v441 = vunpack.c.l.b16 %v402
        %v442 = vunpack.c.l.b16 %v403
        %v443 = vunpack.c.l.b16 %v404
        %v444 = vpack.c.b16 %v429, %v428
        %v445 = vpack.c.b16 %v431, %v430
        %v446 = vpack.c.b16 %v433, %v432
        %v447 = vpack.c.b16 %v435, %v434
        %v448 = vpack.c.b16 %v437, %v436
        %v449 = vpack.c.b16 %v439, %v438
        %v450 = vpack.c.b16 %v441, %v440
        %v451 = vpack.c.b16 %v443, %v442
        %460 = vmatprep.subr.bf16.mxu0 0
        %461 = vmatpush1.bf16.msra.mxu0 %v451
        %462 = vmatprep.subr.bf16.mxu0 0
        %463 = vmatpush1.bf16.msra.mxu0 %v450
        %464 = vmatprep.subr.bf16.mxu0 0
        %465 = vmatpush1.bf16.msra.mxu0 %v449
        %466 = vmatprep.subr.bf16.mxu0 0
        %467 = vmatpush1.bf16.msra.mxu0 %v448
        %468 = vmatprep.subr.bf16.mxu0 0
        %469 = vmatpush1.bf16.msra.mxu0 %v447
        %470 = vmatprep.subr.bf16.mxu0 0
        %471 = vmatpush1.bf16.msra.mxu0 %v446
        %472 = vmatprep.subr.bf16.mxu0 0
        %473 = vmatpush1.bf16.msra.mxu0 %v445
        %474 = vmatprep.subr.bf16.mxu0 0
        %475 = vmatpush1.bf16.msra.mxu0 %v444
        %476 = vmatprep.subr.bf16.mxu0 0
        %477 = vmatpush2.bf16.msra.mxu0 0
        %478 = vmatprep.subr.bf16.mxu0 0
        %479 = vmatpush2.bf16.msra.mxu0 0
        %480 = vmatprep.subr.bf16.mxu0 0
        %481 = vmatpush2.bf16.msra.mxu0 0
        %482 = vmatprep.subr.bf16.mxu0 0
        %483 = vmatpush2.bf16.msra.mxu0 0
        %484 = vmatprep.subr.bf16.mxu0 0
        %485 = vmatpush2.bf16.msra.mxu0 0
        %486 = vmatprep.subr.bf16.mxu0 0
        %487 = vmatpush2.bf16.msra.mxu0 0
        %488 = vmatprep.subr.bf16.mxu0 0
        %489 = vmatpush2.bf16.msra.mxu0 0
        %490 = vmatprep.subr.bf16.mxu0 0
        %491 = vmatpush2.bf16.msra.mxu0 0
        %492 = vmatprep.mubr.bf16.mxu0 0
        %493 = vmatmul.mubr.bf16.gmra.mxu0 %v388
        %v494 = vpop.f32.mrf.mxu0
        %v495 = vadd.f32 %v410, %v494
        %v496 = vpop.f32.mrf.mxu0
        %v497 = vpop.f32.mrf.mxu0
        %v498 = vpop.f32.mrf.mxu0
        %499 = vdwg.mxu0
        %500 = vst [vmem:[%s268] sm:$0xff] %v495
        %s501 = sand.u32 %s141, 1
        %s502 = scalar_lea.sflag [#allocation4], %s501
        %s503 = sand.u32 %s141, 1
        %s504 = smul.addr %s503, 8
        %s505 = scalar_lea.vmem [#allocation8], %s504
        // Predicated region
        $region53: #{tpu_custom_call.1} parent=39 // pred_check
          %p506 = pneg %p151
        $region54: #{tpu_custom_call.1} parent=39 // pred_check_branch
          %508 = sbr.rel (%p506) target = $region56
        $region55: #{tpu_custom_call.1} parent=39 // pred_region
          %s510 = ssub.s32 128, 128
          %511 = vsyncadd %s502, %s510
          %s512 = smul.addr %s23, 128
          %s513 = scalar_lea.hbm %s5, %s512
          %s515 = sshll.u32 %s505, 4
          %s516 = int_to_ptr.vmem [resolvable:$true] %s515
          %518 = dma.vmem_to_hbm [thread:$0]  %s516, 128, %s513, %s502
        $region56: #{tpu_custom_call.1} parent=39 // pred_fallthru
          _
      $region40: #{tpu_custom_call.1} parent=5 // pred_fallthru
        _
      %p519 = scmp.le.s32.totalorder 2, %s18
      // Predicated region
      $region57: #{tpu_custom_call.1} parent=5 // pred_check
        %p520 = pneg %p519
      $region58: #{tpu_custom_call.1} parent=5 // pred_check_branch
        %522 = sbr.rel (%p520) target = $region60
      $region59: #{tpu_custom_call.1} parent=5 // pred_region
        %s523 = ssub.s32 %s18, 2
        // Predicated region
        $region61: #{tpu_custom_call.1} parent=59 // pred_check
          %p524 = pneg %p157
        $region62: #{tpu_custom_call.1} parent=59 // pred_check_branch
          %526 = sbr.rel (%p524) target = $region64
        $region63: #{tpu_custom_call.1} parent=59 // pred_region
          %s527 = sand.u32 %s142, 1
          %s528 = scalar_lea.sflag [#allocation4], %s527
          %s529 = sand.u32 %s142, 1
          %s530 = smul.addr %s529, 8
          %s531 = scalar_lea.vmem [#allocation8], %s530
          %532 = dma.done %s528, 128
        $region64: #{tpu_custom_call.1} parent=59 // pred_fallthru
          _
      $region60: #{tpu_custom_call.1} parent=5 // pred_fallthru
        _
    $region6: #{tpu_custom_call.1} parent=1 // loop_footer
      %s22 = sadd.s32 1, %s18
    $region7: #{tpu_custom_call.1} parent=1 // loop_footer_branch
      %17 = sbr.rel target = $region3
    $region8: #{tpu_custom_call.1} parent=1 // loop_exit
      _
    %533 = vsyncpa [#allocation3], 1
    %s534 = scalar_lea.sflag [#allocation3], 1
    %535 = vsyncpa %s534, 1
    %536 = vsyncpa [#allocation6], 1
    %537 = vsyncpa [#allocation4], 1
    %s538 = scalar_lea.sflag [#allocation4], 1
    %539 = vsyncpa %s538, 1

// kernel: tpu_custom_call.1
$region0: #{tpu_custom_call.1}
  #allocation0 [shape = 'u32[]', space=smem, size = 0x4, offset = 0x4, fixed_abs, tag = 'smem constant byte address 0x4 - core index']
  #allocation1 [shape = 'u32[144,128]{1,0:T(1,128)}', space=vmem, size = 0x12000, scoped, tag = 'internal scratch']
  %s0 = inlined_call_operand.hbm [shape: f32[16,128], index: 0, kind: input, shape index: {}]
  %s1 = inlined_call_operand.hbm [shape: bf16[128,128], index: 1, kind: input, shape index: {}]
  %s2 = inlined_call_operand.vmem [shape: f32[1,128], index: 2, kind: input, shape index: {}]
  %s3 = inlined_call_operand.hbm [shape: bf16[128,128], index: 3, kind: input, shape index: {}]
  %s4 = inlined_call_operand.vmem [shape: f32[1,128], index: 4, kind: input, shape index: {}]
  %s5 = inlined_call_operand.hbm [shape: f32[16,128], index: 5, kind: output, shape index: {}]
  %s6 = sld [smem:[#allocation0]]
  $region65: #{tpu_custom_call.1} parent=0
    _
  %s8 = ssub.s32 1, %s6
  %s9 = scalar_select 0, %s8, %s6
  $region1: #{tpu_custom_call.1} parent=0
    #allocation2 [shape = 'u8[8192]{0}', space=vmem, size = 0x2000, scoped, tag = 'input window, operand 0']
    #allocation3 [shape = 's32[2]{0}', space=sflag, size = 0x8, scoped, tag = 'scoped memory for tpu_custom_call.1']
    #allocation4 [shape = 's32[2]{0}', space=sflag, size = 0x8, scoped, tag = 'scoped memory for tpu_custom_call.1']
    #allocation5 [shape = 'u8[32768]{0}', space=vmem, size = 0x8000, scoped, tag = 'input window, operand 1, single buffered']
    #allocation6 [shape = 's32[1]{0}', space=sflag, size = 0x4, scoped, tag = 'scoped memory for tpu_custom_call.1']
    #allocation7 [shape = 'u8[32768]{0}', space=vmem, size = 0x8000, scoped, tag = 'input window, operand 3, single buffered']
    #allocation8 [shape = 'u8[8192]{0}', space=vmem, size = 0x2000, scoped, tag = 'output window, operand 0']
    %10 = vsyncpa [#allocation3], 0
    %s11 = scalar_lea.sflag [#allocation3], 1
    %12 = vsyncpa %s11, 0
    %13 = vsyncpa [#allocation6], 0
    %14 = vsyncpa [#allocation4], 0
    %s15 = scalar_lea.sflag [#allocation4], 1
    %16 = vsyncpa %s15, 0
    loop: start=0, step=1, limit=4
    $region2: #{tpu_custom_call.1} parent=1 // loop_pre_header
      _
    $region3: #{tpu_custom_call.1} parent=1 // loop_header
      %s18 = sphi 0, %s22
      %p19 = scmp.ge.s32.totalorder %s18, 4
      %s28 = sphi 0, %s30
      %s31 = sphi 0, %s28
      %s32 = sphi 0, %s31
      %s48 = sphi 0, %s32
      %s52 = sphi 0, %s52
      %s54 = sphi 0, %s52
      %s55 = sphi 0, %s54
      %s69 = sphi 0, %s55
      %s73 = sphi 0, %s73
      %s75 = sphi 0, %s73
      %s76 = sphi 0, %s75
      %s90 = sphi 0, %s76
      %s94 = sphi 0, %s94
      %s96 = sphi 0, %s94
      %s97 = sphi 0, %s96
      %s111 = sphi 0, %s97
      %s115 = sphi 0, %s115
      %s117 = sphi 0, %s115
      %s118 = sphi 0, %s117
      %s132 = sphi 0, %s118
      %s138 = sphi 0, %s140
      %s141 = sphi 0, %s138
      %s142 = sphi 0, %s141
      %s158 = sphi 0, %s142
    $region4: #{tpu_custom_call.1} parent=1 // loop_header_branch
      %21 = sbr.rel (%p19) target = $region8
    $region5: #{tpu_custom_call.1} parent=1 // loop_body
      %s23 = ssub.s32 %s18, 1
      %s24 = ssub.s32 %s18, 2
      %s25 = sadd.s32 %s18, 1
      %s26 = ssub.s32 %s18, %s25
      %p27 = scmp.eq.s32.totalorder %s26, 0
      %s29 = sadd.s32 %s28, 1
      %s30 = scalar_select %p27, %s28, %s29
      %p33 = pneg %p27
      %p34 = scmp.eq.s32.totalorder %s18, 1
      %p35 = por %p33, %p34
      %p36 = scmp.ne.s32.totalorder %s28, %s31
      %p37 = scmp.eq.s32.totalorder %s18, 0
      %p38 = por %p36, %p37
      %p39 = scmp.ne.s32.totalorder %s28, %s31
      %p40 = scmp.eq.s32.totalorder %s23, 1
      %p41 = por %p39, %p40
      %p42 = scmp.ne.s32.totalorder %s31, %s32
      %p43 = scmp.eq.s32.totalorder %s23, 0
      %p44 = por %p42, %p43
      %p45 = scmp.ne.s32.totalorder %s31, %s32
      %p46 = scmp.eq.s32.totalorder %s24, 1
      %p47 = por %p45, %p46
      %p49 = scmp.ne.s32.totalorder %s32, %s48
      %p50 = scmp.eq.s32.totalorder %s24, 0
      %p51 = por %p49, %p50
      %s53 = sadd.s32 %s52, 1
      %p56 = scmp.eq.s32.totalorder %s18, 1
      %p57 = scmp.ne.s32.totalorder %s52, %s54
      %p58 = scmp.eq.s32.totalorder %s18, 0
      %p59 = por %p57, %p58
      %p60 = scmp.ne.s32.totalorder %s52, %s54
      %p61 = scmp.eq.s32.totalorder %s23, 1
      %p62 = por %p60, %p61
      %p63 = scmp.ne.s32.totalorder %s54, %s55
      %p64 = scmp.eq.s32.totalorder %s23, 0
      %p65 = por %p63, %p64
      %p66 = scmp.ne.s32.totalorder %s54, %s55
      %p67 = scmp.eq.s32.totalorder %s24, 1
      %p68 = por %p66, %p67
      %p70 = scmp.ne.s32.totalorder %s55, %s69
      %p71 = scmp.eq.s32.totalorder %s24, 0
      %p72 = por %p70, %p71
      %s74 = sadd.s32 %s73, 1
      %p77 = scmp.eq.s32.totalorder %s18, 1
      %p78 = scmp.ne.s32.totalorder %s73, %s75
      %p79 = scmp.eq.s32.totalorder %s18, 0
      %p80 = por %p78, %p79
      %p81 = scmp.ne.s32.totalorder %s73, %s75
      %p82 = scmp.eq.s32.totalorder %s23, 1
      %p83 = por %p81, %p82
      %p84 = scmp.ne.s32.totalorder %s75, %s76
      %p85 = scmp.eq.s32.totalorder %s23, 0
      %p86 = por %p84, %p85
      %p87 = scmp.ne.s32.totalorder %s75, %s76
      %p88 = scmp.eq.s32.totalorder %s24, 1
      %p89 = por %p87, %p88
      %p91 = scmp.ne.s32.totalorder %s76, %s90
      %p92 = scmp.eq.s32.totalorder %s24, 0
      %p93 = por %p91, %p92
      %s95 = sadd.s32 %s94, 1
      %p98 = scmp.eq.s32.totalorder %s18, 1
      %p99 = scmp.ne.s32.totalorder %s94, %s96
      %p100 = scmp.eq.s32.totalorder %s18, 0
      %p101 = por %p99, %p100
      %p102 = scmp.ne.s32.totalorder %s94, %s96
      %p103 = scmp.eq.s32.totalorder %s23, 1
      %p104 = por %p102, %p103
      %p105 = scmp.ne.s32.totalorder %s96, %s97
      %p106 = scmp.eq.s32.totalorder %s23, 0
      %p107 = por %p105, %p106
      %p108 = scmp.ne.s32.totalorder %s96, %s97
      %p109 = scmp.eq.s32.totalorder %s24, 1
      %p110 = por %p108, %p109
      %p112 = scmp.ne.s32.totalorder %s97, %s111
      %p113 = scmp.eq.s32.totalorder %s24, 0
      %p114 = por %p112, %p113
      %s116 = sadd.s32 %s115, 1
      %p119 = scmp.eq.s32.totalorder %s18, 1
      %p120 = scmp.ne.s32.totalorder %s115, %s117
      %p121 = scmp.eq.s32.totalorder %s18, 0
      %p122 = por %p120, %p121
      %p123 = scmp.ne.s32.totalorder %s115, %s117
      %p124 = scmp.eq.s32.totalorder %s23, 1
      %p125 = por %p123, %p124
      %p126 = scmp.ne.s32.totalorder %s117, %s118
      %p127 = scmp.eq.s32.totalorder %s23, 0
      %p128 = por %p126, %p127
      %p129 = scmp.ne.s32.totalorder %s117, %s118
      %p130 = scmp.eq.s32.totalorder %s24, 1
      %p131 = por %p129, %p130
      %p133 = scmp.ne.s32.totalorder %s118, %s132
      %p134 = scmp.eq.s32.totalorder %s24, 0
      %p135 = por %p133, %p134
      %s136 = ssub.s32 %s18, %s25
      %p137 = scmp.eq.s32.totalorder %s136, 0
      %s139 = sadd.s32 %s138, 1
      %s140 = scalar_select %p137, %s138, %s139
      %p143 = pneg %p137
      %p144 = scmp.eq.s32.totalorder %s18, 1
      %p145 = por %p143, %p144
      %p146 = scmp.ne.s32.totalorder %s138, %s141
      %p147 = scmp.eq.s32.totalorder %s18, 0
      %p148 = por %p146, %p147
      %p149 = scmp.ne.s32.totalorder %s138, %s141
      %p150 = scmp.eq.s32.totalorder %s23, 1
      %p151 = por %p149, %p150
      %p152 = scmp.ne.s32.totalorder %s141, %s142
      %p153 = scmp.eq.s32.totalorder %s23, 0
      %p154 = por %p152, %p153
      %p155 = scmp.ne.s32.totalorder %s141, %s142
      %p156 = scmp.eq.s32.totalorder %s24, 1
      %p157 = por %p155, %p156
      %p159 = scmp.ne.s32.totalorder %s142, %s158
      %p160 = scmp.eq.s32.totalorder %s24, 0
      %p161 = por %p159, %p160
      %p162 = scmp.le.s32.totalorder 1, %s18
      %p163 = scmp.lt.s32.totalorder %s18, 3
      %p164 = pnand %p162, %p163
      %p165 = pneg %p164
      // Predicated region
      $region9: #{tpu_custom_call.1} parent=5 // pred_check
        _
      $region10: #{tpu_custom_call.1} parent=5 // pred_check_branch
        %167 = sbr.rel (%p164) target = $region12
      $region11: #{tpu_custom_call.1} parent=5 // pred_region
        %s168 = ssub.s32 %s18, 1
        // Predicated region
        $region13: #{tpu_custom_call.1} parent=11 // pred_check
          %p169 = pneg %p65
        $region14: #{tpu_custom_call.1} parent=11 // pred_check_branch
          %171 = sbr.rel (%p169) target = $region16
        $region15: #{tpu_custom_call.1} parent=11 // pred_region
          %s173 = ssub.s32 1024, 1024
          %174 = vsyncadd [#allocation6], %s173
          %s175 = sshll.u32 [#allocation5], 4
          %s176 = int_to_ptr.vmem [resolvable:$true] %s175
          %181 = dma.hbm_to_vmem [thread:$0]  %s1, 1024, %s176, [#allocation6], 64, 64, 4
        $region16: #{tpu_custom_call.1} parent=11 // pred_fallthru
          _
        // Predicated region
        $region17: #{tpu_custom_call.1} parent=11 // pred_check
          %p182 = pneg %p86
        $region18: #{tpu_custom_call.1} parent=11 // pred_check_branch
          %184 = sbr.rel (%p182) target = $region20
        $region19: #{tpu_custom_call.1} parent=11 // pred_region
          _
        $region20: #{tpu_custom_call.1} parent=11 // pred_fallthru
          _
        // Predicated region
        $region21: #{tpu_custom_call.1} parent=11 // pred_check
          %p185 = pneg %p107
        $region22: #{tpu_custom_call.1} parent=11 // pred_check_branch
          %187 = sbr.rel (%p185) target = $region24
        $region23: #{tpu_custom_call.1} parent=11 // pred_region
          %s189 = ssub.s32 1024, 1024
          %190 = vsyncadd [#allocation6], %s189
          %s191 = sshll.u32 [#allocation7], 4
          %s192 = int_to_ptr.vmem [resolvable:$true] %s191
          %197 = dma.hbm_to_vmem [thread:$0]  %s3, 1024, %s192, [#allocation6], 64, 64, 4
        $region24: #{tpu_custom_call.1} parent=11 // pred_fallthru
          _
        // Predicated region
        $region25: #{tpu_custom_call.1} parent=11 // pred_check
          %p198 = pneg %p128
        $region26: #{tpu_custom_call.1} parent=11 // pred_check_branch
          %200 = sbr.rel (%p198) target = $region28
        $region27: #{tpu_custom_call.1} parent=11 // pred_region
          _
        $region28: #{tpu_custom_call.1} parent=11 // pred_fallthru
          _
      $region12: #{tpu_custom_call.1} parent=5 // pred_fallthru
        _
      %p201 = scmp.lt.s32.totalorder %s18, 2
      // Predicated region
      $region29: #{tpu_custom_call.1} parent=5 // pred_check
        %p202 = pneg %p201
      $region30: #{tpu_custom_call.1} parent=5 // pred_check_branch
        %204 = sbr.rel (%p202) target = $region32
      $region31: #{tpu_custom_call.1} parent=5 // pred_region
        // Predicated region
        $region33: #{tpu_custom_call.1} parent=31 // pred_check
          %p205 = pneg %p38
        $region34: #{tpu_custom_call.1} parent=31 // pred_check_branch
          %207 = sbr.rel (%p205) target = $region36
        $region35: #{tpu_custom_call.1} parent=31 // pred_region
          %s208 = sand.u32 %s28, 1
          %s209 = scalar_lea.sflag [#allocation3], %s208
          %s210 = sand.u32 %s28, 1
          %s211 = smul.addr %s210, 8
          %s212 = scalar_lea.vmem [#allocation2], %s211
          %s214 = ssub.s32 128, 128
          %215 = vsyncadd %s209, %s214
          %s216 = smul.addr %s18, 128
          %s217 = scalar_lea.hbm %s0, %s216
          %s219 = sshll.u32 %s212, 4
          %s220 = int_to_ptr.vmem [resolvable:$true] %s219
          %222 = dma.hbm_to_vmem [thread:$0]  %s217, 128, %s220, %s209
        $region36: #{tpu_custom_call.1} parent=31 // pred_fallthru
          _
      $region32: #{tpu_custom_call.1} parent=5 // pred_fallthru
        _
      %p223 = scmp.le.s32.totalorder 1, %s18
      %p224 = scmp.lt.s32.totalorder %s18, 3
      %p225 = pnand %p223, %p224
      %p226 = pneg %p225
      // Predicated region
      $region37: #{tpu_custom_call.1} parent=5 // pred_check
        _
      $region38: #{tpu_custom_call.1} parent=5 // pred_check_branch
        %228 = sbr.rel (%p225) target = $region40
      $region39: #{tpu_custom_call.1} parent=5 // pred_region
        %s229 = ssub.s32 %s18, 1
        %s230 = sand.u32 %s31, 1
        %s231 = scalar_lea.sflag [#allocation3], %s230
        %s232 = sand.u32 %s31, 1
        %s233 = smul.addr %s232, 8
        %s234 = scalar_lea.vmem [#allocation2], %s233
        // Predicated region
        $region41: #{tpu_custom_call.1} parent=39 // pred_check
          %p235 = pneg %p44
        $region42: #{tpu_custom_call.1} parent=39 // pred_check_branch
          %237 = sbr.rel (%p235) target = $region44
        $region43: #{tpu_custom_call.1} parent=39 // pred_region
          %238 = dma.done %s231, 128
        $region44: #{tpu_custom_call.1} parent=39 // pred_fallthru
          _
        // Predicated region
        $region45: #{tpu_custom_call.1} parent=39 // pred_check
          %p239 = pneg %p65
        $region46: #{tpu_custom_call.1} parent=39 // pred_check_branch
          %241 = sbr.rel (%p239) target = $region48
        $region47: #{tpu_custom_call.1} parent=39 // pred_region
          %242 = dma.done [#allocation6], 1024
        $region48: #{tpu_custom_call.1} parent=39 // pred_fallthru
          _
        // Predicated region
        $region49: #{tpu_custom_call.1} parent=39 // pred_check
          %p243 = pneg %p107
        $region50: #{tpu_custom_call.1} parent=39 // pred_check_branch
          %245 = sbr.rel (%p243) target = $region52
        $region51: #{tpu_custom_call.1} parent=39 // pred_region
          %246 = dma.done [#allocation6], 1024
        $region52: #{tpu_custom_call.1} parent=39 // pred_fallthru
          _
        %s247 = sand.u32 %s31, 1
        %s248 = scalar_lea.sflag [#allocation3], %s247
        %s249 = sand.u32 %s31, 1
        %s250 = smul.addr %s249, 8
        %s251 = scalar_lea.vmem [#allocation2], %s250
        %p252 = pneg %p44
        %p253 = pneg %p41
        %p254 = pneg %p65
        %p255 = pneg %p62
        %p256 = pneg %p86
        %p257 = pneg %p83
        %p258 = pneg %p107
        %p259 = pneg %p104
        %p260 = pneg %p128
        %p261 = pneg %p125
        %p262 = pneg %p154
        %p263 = pneg %p151
        %s264 = sand.u32 %s141, 1
        %s265 = scalar_lea.sflag [#allocation4], %s264
        %s266 = sand.u32 %s141, 1
        %s267 = smul.addr %s266, 8
        %s268 = scalar_lea.vmem [#allocation8], %s267
        %v273 = vld [vmem:[%s234] sm:$0xff]
        %v274 = vpack.c.bf16 %v273, %v273
        %v275 = vld [vmem:[#allocation5] sm:$0xf]
        %v276 = vld [vmem:[#allocation5 + $0x4] sm:$0xf]
        %v277 = vld [vmem:[#allocation5 + $0x8] sm:$0xf]
        %v278 = vld [vmem:[#allocation5 + $0xc] sm:$0xf]
        %v279 = vld [vmem:[#allocation5 + $0x10] sm:$0xf]
        %v280 = vld [vmem:[#allocation5 + $0x14] sm:$0xf]
        %v281 = vld [vmem:[#allocation5 + $0x18] sm:$0xf]
        %v282 = vld [vmem:[#allocation5 + $0x1c] sm:$0xf]
        %v283 = vld [vmem:[#allocation5 + $0x20] sm:$0xf]
        %v284 = vld [vmem:[#allocation5 + $0x24] sm:$0xf]
        %v285 = vld [vmem:[#allocation5 + $0x28] sm:$0xf]
        %v286 = vld [vmem:[#allocation5 + $0x2c] sm:$0xf]
        %v287 = vld [vmem:[#allocation5 + $0x30] sm:$0xf]
        %v288 = vld [vmem:[#allocation5 + $0x34] sm:$0xf]
        %v289 = vld [vmem:[#allocation5 + $0x38] sm:$0xf]
        %v290 = vld [vmem:[#allocation5 + $0x3c] sm:$0xf]
        %v307 = vunpack.c.l.b16 %v275
        %v308 = vunpack.c.l.b16 %v276
        %v309 = vunpack.c.l.b16 %v277
        %v310 = vunpack.c.l.b16 %v278
        %v311 = vunpack.c.l.b16 %v279
        %v312 = vunpack.c.l.b16 %v280
        %v313 = vunpack.c.l.b16 %v281
        %v314 = vunpack.c.l.b16 %v282
        %v315 = vunpack.c.l.b16 %v283
        %v316 = vunpack.c.l.b16 %v284
        %v317 = vunpack.c.l.b16 %v285
        %v318 = vunpack.c.l.b16 %v286
        %v319 = vunpack.c.l.b16 %v287
        %v320 = vunpack.c.l.b16 %v288
        %v321 = vunpack.c.l.b16 %v289
        %v322 = vunpack.c.l.b16 %v290
        %v323 = vpack.c.b16 %v308, %v307
        %v324 = vpack.c.b16 %v310, %v309
        %v325 = vpack.c.b16 %v312, %v311
        %v326 = vpack.c.b16 %v314, %v313
        %v327 = vpack.c.b16 %v316, %v315
        %v328 = vpack.c.b16 %v318, %v317
        %v329 = vpack.c.b16 %v320, %v319
        %v330 = vpack.c.b16 %v322, %v321
        %339 = vmatprep.subr.bf16.mxu0 0
        %340 = vmatpush1.bf16.msra.mxu0 %v330
        %341 = vmatprep.subr.bf16.mxu0 0
        %342 = vmatpush1.bf16.msra.mxu0 %v329
        %343 = vmatprep.subr.bf16.mxu0 0
        %344 = vmatpush1.bf16.msra.mxu0 %v328
        %345 = vmatprep.subr.bf16.mxu0 0
        %346 = vmatpush1.bf16.msra.mxu0 %v327
        %347 = vmatprep.subr.bf16.mxu0 0
        %348 = vmatpush1.bf16.msra.mxu0 %v326
        %349 = vmatprep.subr.bf16.mxu0 0
        %350 = vmatpush1.bf16.msra.mxu0 %v325
        %351 = vmatprep.subr.bf16.mxu0 0
        %352 = vmatpush1.bf16.msra.mxu0 %v324
        %353 = vmatprep.subr.bf16.mxu0 0
        %354 = vmatpush1.bf16.msra.mxu0 %v323
        %355 = vmatprep.subr.bf16.mxu0 0
        %356 = vmatpush2.bf16.msra.mxu0 0
        %357 = vmatprep.subr.bf16.mxu0 0
        %358 = vmatpush2.bf16.msra.mxu0 0
        %359 = vmatprep.subr.bf16.mxu0 0
        %360 = vmatpush2.bf16.msra.mxu0 0
        %361 = vmatprep.subr.bf16.mxu0 0
        %362 = vmatpush2.bf16.msra.mxu0 0
        %363 = vmatprep.subr.bf16.mxu0 0
        %364 = vmatpush2.bf16.msra.mxu0 0
        %365 = vmatprep.subr.bf16.mxu0 0
        %366 = vmatpush2.bf16.msra.mxu0 0
        %367 = vmatprep.subr.bf16.mxu0 0
        %368 = vmatpush2.bf16.msra.mxu0 0
        %369 = vmatprep.subr.bf16.mxu0 0
        %370 = vmatpush2.bf16.msra.mxu0 0
        %371 = vmatprep.mubr.bf16.mxu0 0
        %372 = vmatmul.mubr.bf16.gmra.mxu0 %v274
        %v373 = vpop.f32.mrf.mxu0
        %v374 = vadd.f32 0.0, %v373
        %v375 = vpop.f32.mrf.mxu0
        %v376 = vpop.f32.mrf.mxu0
        %v377 = vpop.f32.mrf.mxu0
        %378 = vdwg.mxu0
        %v379 = vpack.c.bf16 %v374, %v374
        %v380 = vld [vmem:[%s2] sm:$0x1]
        %v381 = vpack.c.bf16 %v380, %v380
        %v383 = vpack.i.b16 %v381, %v381
        %v385 = vlaneseq
        %v386 = vshrl.u32 %v385, 7
        %v387 = vsub.s32 0, %v386
        %v388 = vrot.slane %v383, %v387
        %v389 = vadd.bf16 %v379, %v388
        %v390 = vmul.bf16 %v389, 1056980736
        %v391 = vmul.bf16 %v389, 1060454197
        %v392 = verf.bf16.pop %v391
        %v393 = vadd.bf16 %v392, 1065369472
        %v394 = vmul.bf16 %v390, %v393
        %v395 = vld [vmem:[#allocation7] sm:$0xf]
        %v396 = vld [vmem:[#allocation7 + $0x4] sm:$0xf]
        %v397 = vld [vmem:[#allocation7 + $0x8] sm:$0xf]
        %v398 = vld [vmem:[#allocation7 + $0xc] sm:$0xf]
        %v399 = vld [vmem:[#allocation7 + $0x10] sm:$0xf]
        %v400 = vld [vmem:[#allocation7 + $0x14] sm:$0xf]
        %v401 = vld [vmem:[#allocation7 + $0x18] sm:$0xf]
        %v402 = vld [vmem:[#allocation7 + $0x1c] sm:$0xf]
        %v403 = vld [vmem:[#allocation7 + $0x20] sm:$0xf]
        %v404 = vld [vmem:[#allocation7 + $0x24] sm:$0xf]
        %v405 = vld [vmem:[#allocation7 + $0x28] sm:$0xf]
        %v406 = vld [vmem:[#allocation7 + $0x2c] sm:$0xf]
        %v407 = vld [vmem:[#allocation7 + $0x30] sm:$0xf]
        %v408 = vld [vmem:[#allocation7 + $0x34] sm:$0xf]
        %v409 = vld [vmem:[#allocation7 + $0x38] sm:$0xf]
        %v410 = vld [vmem:[#allocation7 + $0x3c] sm:$0xf]
        %v411 = vld [vmem:[%s4] sm:$0x1]
        %v413 = vlaneseq
        %v414 = vshrl.u32 %v413, 7
        %v415 = vsub.s32 0, %v414
        %v416 = vrot.slane %v411, %v415
        %v434 = vunpack.c.l.b16 %v395
        %v435 = vunpack.c.l.b16 %v396
        %v436 = vunpack.c.l.b16 %v397
        %v437 = vunpack.c.l.b16 %v398
        %v438 = vunpack.c.l.b16 %v399
        %v439 = vunpack.c.l.b16 %v400
        %v440 = vunpack.c.l.b16 %v401
        %v441 = vunpack.c.l.b16 %v402
        %v442 = vunpack.c.l.b16 %v403
        %v443 = vunpack.c.l.b16 %v404
        %v444 = vunpack.c.l.b16 %v405
        %v445 = vunpack.c.l.b16 %v406
        %v446 = vunpack.c.l.b16 %v407
        %v447 = vunpack.c.l.b16 %v408
        %v448 = vunpack.c.l.b16 %v409
        %v449 = vunpack.c.l.b16 %v410
        %v450 = vpack.c.b16 %v435, %v434
        %v451 = vpack.c.b16 %v437, %v436
        %v452 = vpack.c.b16 %v439, %v438
        %v453 = vpack.c.b16 %v441, %v440
        %v454 = vpack.c.b16 %v443, %v442
        %v455 = vpack.c.b16 %v445, %v444
        %v456 = vpack.c.b16 %v447, %v446
        %v457 = vpack.c.b16 %v449, %v448
        %466 = vmatprep.subr.bf16.mxu0 0
        %467 = vmatpush1.bf16.msra.mxu0 %v457
        %468 = vmatprep.subr.bf16.mxu0 0
        %469 = vmatpush1.bf16.msra.mxu0 %v456
        %470 = vmatprep.subr.bf16.mxu0 0
        %471 = vmatpush1.bf16.msra.mxu0 %v455
        %472 = vmatprep.subr.bf16.mxu0 0
        %473 = vmatpush1.bf16.msra.mxu0 %v454
        %474 = vmatprep.subr.bf16.mxu0 0
        %475 = vmatpush1.bf16.msra.mxu0 %v453
        %476 = vmatprep.subr.bf16.mxu0 0
        %477 = vmatpush1.bf16.msra.mxu0 %v452
        %478 = vmatprep.subr.bf16.mxu0 0
        %479 = vmatpush1.bf16.msra.mxu0 %v451
        %480 = vmatprep.subr.bf16.mxu0 0
        %481 = vmatpush1.bf16.msra.mxu0 %v450
        %482 = vmatprep.subr.bf16.mxu0 0
        %483 = vmatpush2.bf16.msra.mxu0 0
        %484 = vmatprep.subr.bf16.mxu0 0
        %485 = vmatpush2.bf16.msra.mxu0 0
        %486 = vmatprep.subr.bf16.mxu0 0
        %487 = vmatpush2.bf16.msra.mxu0 0
        %488 = vmatprep.subr.bf16.mxu0 0
        %489 = vmatpush2.bf16.msra.mxu0 0
        %490 = vmatprep.subr.bf16.mxu0 0
        %491 = vmatpush2.bf16.msra.mxu0 0
        %492 = vmatprep.subr.bf16.mxu0 0
        %493 = vmatpush2.bf16.msra.mxu0 0
        %494 = vmatprep.subr.bf16.mxu0 0
        %495 = vmatpush2.bf16.msra.mxu0 0
        %496 = vmatprep.subr.bf16.mxu0 0
        %497 = vmatpush2.bf16.msra.mxu0 0
        %498 = vmatprep.mubr.bf16.mxu0 0
        %499 = vmatmul.mubr.bf16.gmra.mxu0 %v394
        %v500 = vpop.f32.mrf.mxu0
        %v501 = vadd.f32 %v416, %v500
        %v502 = vpop.f32.mrf.mxu0
        %v503 = vpop.f32.mrf.mxu0
        %v504 = vpop.f32.mrf.mxu0
        %505 = vdwg.mxu0
        %506 = vst [vmem:[%s268] sm:$0xff] %v501
        %s507 = sand.u32 %s141, 1
        %s508 = scalar_lea.sflag [#allocation4], %s507
        %s509 = sand.u32 %s141, 1
        %s510 = smul.addr %s509, 8
        %s511 = scalar_lea.vmem [#allocation8], %s510
        // Predicated region
        $region53: #{tpu_custom_call.1} parent=39 // pred_check
          %p512 = pneg %p151
        $region54: #{tpu_custom_call.1} parent=39 // pred_check_branch
          %514 = sbr.rel (%p512) target = $region56
        $region55: #{tpu_custom_call.1} parent=39 // pred_region
          %s516 = ssub.s32 128, 128
          %517 = vsyncadd %s508, %s516
          %s518 = smul.addr %s23, 128
          %s519 = scalar_lea.hbm %s5, %s518
          %s521 = sshll.u32 %s511, 4
          %s522 = int_to_ptr.vmem [resolvable:$true] %s521
          %524 = dma.vmem_to_hbm [thread:$0]  %s522, 128, %s519, %s508
        $region56: #{tpu_custom_call.1} parent=39 // pred_fallthru
          _
      $region40: #{tpu_custom_call.1} parent=5 // pred_fallthru
        _
      %p525 = scmp.le.s32.totalorder 2, %s18
      // Predicated region
      $region57: #{tpu_custom_call.1} parent=5 // pred_check
        %p526 = pneg %p525
      $region58: #{tpu_custom_call.1} parent=5 // pred_check_branch
        %528 = sbr.rel (%p526) target = $region60
      $region59: #{tpu_custom_call.1} parent=5 // pred_region
        %s529 = ssub.s32 %s18, 2
        // Predicated region
        $region61: #{tpu_custom_call.1} parent=59 // pred_check
          %p530 = pneg %p157
        $region62: #{tpu_custom_call.1} parent=59 // pred_check_branch
          %532 = sbr.rel (%p530) target = $region64
        $region63: #{tpu_custom_call.1} parent=59 // pred_region
          %s533 = sand.u32 %s142, 1
          %s534 = scalar_lea.sflag [#allocation4], %s533
          %s535 = sand.u32 %s142, 1
          %s536 = smul.addr %s535, 8
          %s537 = scalar_lea.vmem [#allocation8], %s536
          %538 = dma.done %s534, 128
        $region64: #{tpu_custom_call.1} parent=59 // pred_fallthru
          _
      $region60: #{tpu_custom_call.1} parent=5 // pred_fallthru
        _
    $region6: #{tpu_custom_call.1} parent=1 // loop_footer
      %s22 = sadd.s32 1, %s18
    $region7: #{tpu_custom_call.1} parent=1 // loop_footer_branch
      %17 = sbr.rel target = $region3
    $region8: #{tpu_custom_call.1} parent=1 // loop_exit
      _
    %539 = vsyncpa [#allocation3], 1
    %s540 = scalar_lea.sflag [#allocation3], 1
    %541 = vsyncpa %s540, 1
    %542 = vsyncpa [#allocation6], 1
    %543 = vsyncpa [#allocation4], 1
    %s544 = scalar_lea.sflag [#allocation4], 1
    %545 = vsyncpa %s544, 1

// kernel: tpu_custom_call.1
$region0: #{tpu_custom_call.1}
  #allocation0 [shape = 'u32[]', space=smem, size = 0x4, offset = 0x4, fixed_abs, tag = 'smem constant byte address 0x4 - core index']
  #allocation1 [shape = 'u32[144,128]{1,0:T(1,128)}', space=vmem, size = 0x12000, scoped, tag = 'internal scratch']
  %s0 = inlined_call_operand.hbm [shape: f32[16,128], index: 0, kind: input, shape index: {}]
  %s1 = inlined_call_operand.hbm [shape: bf16[128,128], index: 1, kind: input, shape index: {}]
  %s2 = inlined_call_operand.vmem [shape: f32[1,128], index: 2, kind: input, shape index: {}]
  %s3 = inlined_call_operand.hbm [shape: bf16[128,128], index: 3, kind: input, shape index: {}]
  %s4 = inlined_call_operand.vmem [shape: f32[1,128], index: 4, kind: input, shape index: {}]
  %s5 = inlined_call_operand.hbm [shape: f32[16,128], index: 5, kind: output, shape index: {}]
  %s6 = sld [smem:[#allocation0]]
  $region65: #{tpu_custom_call.1} parent=0
    _
  %s8 = ssub.s32 1, %s6
  %s9 = scalar_select 0, %s8, %s6
  $region1: #{tpu_custom_call.1} parent=0
    #allocation2 [shape = 'u8[8192]{0}', space=vmem, size = 0x2000, scoped, tag = 'input window, operand 0']
    #allocation3 [shape = 's32[2]{0}', space=sflag, size = 0x8, scoped, tag = 'scoped memory for tpu_custom_call.1']
    #allocation4 [shape = 's32[2]{0}', space=sflag, size = 0x8, scoped, tag = 'scoped memory for tpu_custom_call.1']
    #allocation5 [shape = 'u8[32768]{0}', space=vmem, size = 0x8000, scoped, tag = 'input window, operand 1, single buffered']
    #allocation6 [shape = 's32[1]{0}', space=sflag, size = 0x4, scoped, tag = 'scoped memory for tpu_custom_call.1']
    #allocation7 [shape = 'u8[32768]{0}', space=vmem, size = 0x8000, scoped, tag = 'input window, operand 3, single buffered']
    #allocation8 [shape = 'u8[8192]{0}', space=vmem, size = 0x2000, scoped, tag = 'output window, operand 0']
    %10 = vsyncpa [#allocation3], 0
    %s11 = scalar_lea.sflag [#allocation3], 1
    %12 = vsyncpa %s11, 0
    %13 = vsyncpa [#allocation6], 0
    %14 = vsyncpa [#allocation4], 0
    %s15 = scalar_lea.sflag [#allocation4], 1
    %16 = vsyncpa %s15, 0
    loop: start=0, step=1, limit=4
    $region2: #{tpu_custom_call.1} parent=1 // loop_pre_header
      _
    $region3: #{tpu_custom_call.1} parent=1 // loop_header
      %s18 = sphi 0, %s22
      %p19 = scmp.ge.s32.totalorder %s18, 4
      %s28 = sphi 0, %s30
      %s31 = sphi 0, %s28
      %s32 = sphi 0, %s31
      %s48 = sphi 0, %s32
      %s52 = sphi 0, %s52
      %s54 = sphi 0, %s52
      %s55 = sphi 0, %s54
      %s69 = sphi 0, %s55
      %s73 = sphi 0, %s73
      %s75 = sphi 0, %s73
      %s76 = sphi 0, %s75
      %s90 = sphi 0, %s76
      %s94 = sphi 0, %s94
      %s96 = sphi 0, %s94
      %s97 = sphi 0, %s96
      %s111 = sphi 0, %s97
      %s115 = sphi 0, %s115
      %s117 = sphi 0, %s115
      %s118 = sphi 0, %s117
      %s132 = sphi 0, %s118
      %s138 = sphi 0, %s140
      %s141 = sphi 0, %s138
      %s142 = sphi 0, %s141
      %s158 = sphi 0, %s142
    $region4: #{tpu_custom_call.1} parent=1 // loop_header_branch
      %21 = sbr.rel (%p19) target = $region8
    $region5: #{tpu_custom_call.1} parent=1 // loop_body
      %s23 = ssub.s32 %s18, 1
      %s24 = ssub.s32 %s18, 2
      %s25 = sadd.s32 %s18, 1
      %s26 = ssub.s32 %s18, %s25
      %p27 = scmp.eq.s32.totalorder %s26, 0
      %s29 = sadd.s32 %s28, 1
      %s30 = scalar_select %p27, %s28, %s29
      %p33 = pneg %p27
      %p34 = scmp.eq.s32.totalorder %s18, 1
      %p35 = por %p33, %p34
      %p36 = scmp.ne.s32.totalorder %s28, %s31
      %p37 = scmp.eq.s32.totalorder %s18, 0
      %p38 = por %p36, %p37
      %p39 = scmp.ne.s32.totalorder %s28, %s31
      %p40 = scmp.eq.s32.totalorder %s23, 1
      %p41 = por %p39, %p40
      %p42 = scmp.ne.s32.totalorder %s31, %s32
      %p43 = scmp.eq.s32.totalorder %s23, 0
      %p44 = por %p42, %p43
      %p45 = scmp.ne.s32.totalorder %s31, %s32
      %p46 = scmp.eq.s32.totalorder %s24, 1
      %p47 = por %p45, %p46
      %p49 = scmp.ne.s32.totalorder %s32, %s48
      %p50 = scmp.eq.s32.totalorder %s24, 0
      %p51 = por %p49, %p50
      %s53 = sadd.s32 %s52, 1
      %p56 = scmp.eq.s32.totalorder %s18, 1
      %p57 = scmp.ne.s32.totalorder %s52, %s54
      %p58 = scmp.eq.s32.totalorder %s18, 0
      %p59 = por %p57, %p58
      %p60 = scmp.ne.s32.totalorder %s52, %s54
      %p61 = scmp.eq.s32.totalorder %s23, 1
      %p62 = por %p60, %p61
      %p63 = scmp.ne.s32.totalorder %s54, %s55
      %p64 = scmp.eq.s32.totalorder %s23, 0
      %p65 = por %p63, %p64
      %p66 = scmp.ne.s32.totalorder %s54, %s55
      %p67 = scmp.eq.s32.totalorder %s24, 1
      %p68 = por %p66, %p67
      %p70 = scmp.ne.s32.totalorder %s55, %s69
      %p71 = scmp.eq.s32.totalorder %s24, 0
      %p72 = por %p70, %p71
      %s74 = sadd.s32 %s73, 1
      %p77 = scmp.eq.s32.totalorder %s18, 1
      %p78 = scmp.ne.s32.totalorder %s73, %s75
      %p79 = scmp.eq.s32.totalorder %s18, 0
      %p80 = por %p78, %p79
      %p81 = scmp.ne.s32.totalorder %s73, %s75
      %p82 = scmp.eq.s32.totalorder %s23, 1
      %p83 = por %p81, %p82
      %p84 = scmp.ne.s32.totalorder %s75, %s76
      %p85 = scmp.eq.s32.totalorder %s23, 0
      %p86 = por %p84, %p85
      %p87 = scmp.ne.s32.totalorder %s75, %s76
      %p88 = scmp.eq.s32.totalorder %s24, 1
      %p89 = por %p87, %p88
      %p91 = scmp.ne.s32.totalorder %s76, %s90
      %p92 = scmp.eq.s32.totalorder %s24, 0
      %p93 = por %p91, %p92
      %s95 = sadd.s32 %s94, 1
      %p98 = scmp.eq.s32.totalorder %s18, 1
      %p99 = scmp.ne.s32.totalorder %s94, %s96
      %p100 = scmp.eq.s32.totalorder %s18, 0
      %p101 = por %p99, %p100
      %p102 = scmp.ne.s32.totalorder %s94, %s96
      %p103 = scmp.eq.s32.totalorder %s23, 1
      %p104 = por %p102, %p103
      %p105 = scmp.ne.s32.totalorder %s96, %s97
      %p106 = scmp.eq.s32.totalorder %s23, 0
      %p107 = por %p105, %p106
      %p108 = scmp.ne.s32.totalorder %s96, %s97
      %p109 = scmp.eq.s32.totalorder %s24, 1
      %p110 = por %p108, %p109
      %p112 = scmp.ne.s32.totalorder %s97, %s111
      %p113 = scmp.eq.s32.totalorder %s24, 0
      %p114 = por %p112, %p113
      %s116 = sadd.s32 %s115, 1
      %p119 = scmp.eq.s32.totalorder %s18, 1
      %p120 = scmp.ne.s32.totalorder %s115, %s117
      %p121 = scmp.eq.s32.totalorder %s18, 0
      %p122 = por %p120, %p121
      %p123 = scmp.ne.s32.totalorder %s115, %s117
      %p124 = scmp.eq.s32.totalorder %s23, 1
      %p125 = por %p123, %p124
      %p126 = scmp.ne.s32.totalorder %s117, %s118
      %p127 = scmp.eq.s32.totalorder %s23, 0
      %p128 = por %p126, %p127
      %p129 = scmp.ne.s32.totalorder %s117, %s118
      %p130 = scmp.eq.s32.totalorder %s24, 1
      %p131 = por %p129, %p130
      %p133 = scmp.ne.s32.totalorder %s118, %s132
      %p134 = scmp.eq.s32.totalorder %s24, 0
      %p135 = por %p133, %p134
      %s136 = ssub.s32 %s18, %s25
      %p137 = scmp.eq.s32.totalorder %s136, 0
      %s139 = sadd.s32 %s138, 1
      %s140 = scalar_select %p137, %s138, %s139
      %p143 = pneg %p137
      %p144 = scmp.eq.s32.totalorder %s18, 1
      %p145 = por %p143, %p144
      %p146 = scmp.ne.s32.totalorder %s138, %s141
      %p147 = scmp.eq.s32.totalorder %s18, 0
      %p148 = por %p146, %p147
      %p149 = scmp.ne.s32.totalorder %s138, %s141
      %p150 = scmp.eq.s32.totalorder %s23, 1
      %p151 = por %p149, %p150
      %p152 = scmp.ne.s32.totalorder %s141, %s142
      %p153 = scmp.eq.s32.totalorder %s23, 0
      %p154 = por %p152, %p153
      %p155 = scmp.ne.s32.totalorder %s141, %s142
      %p156 = scmp.eq.s32.totalorder %s24, 1
      %p157 = por %p155, %p156
      %p159 = scmp.ne.s32.totalorder %s142, %s158
      %p160 = scmp.eq.s32.totalorder %s24, 0
      %p161 = por %p159, %p160
      %p162 = scmp.le.s32.totalorder 1, %s18
      %p163 = scmp.lt.s32.totalorder %s18, 3
      %p164 = pnand %p162, %p163
      %p165 = pneg %p164
      // Predicated region
      $region9: #{tpu_custom_call.1} parent=5 // pred_check
        _
      $region10: #{tpu_custom_call.1} parent=5 // pred_check_branch
        %167 = sbr.rel (%p164) target = $region12
      $region11: #{tpu_custom_call.1} parent=5 // pred_region
        %s168 = ssub.s32 %s18, 1
        // Predicated region
        $region13: #{tpu_custom_call.1} parent=11 // pred_check
          %p169 = pneg %p65
        $region14: #{tpu_custom_call.1} parent=11 // pred_check_branch
          %171 = sbr.rel (%p169) target = $region16
        $region15: #{tpu_custom_call.1} parent=11 // pred_region
          %s173 = ssub.s32 1024, 1024
          %174 = vsyncadd [#allocation6], %s173
          %s175 = sshll.u32 [#allocation5], 4
          %s176 = int_to_ptr.vmem [resolvable:$true] %s175
          %181 = dma.hbm_to_vmem [thread:$0]  %s1, 1024, %s176, [#allocation6], 64, 64, 4
        $region16: #{tpu_custom_call.1} parent=11 // pred_fallthru
          _
        // Predicated region
        $region17: #{tpu_custom_call.1} parent=11 // pred_check
          %p182 = pneg %p86
        $region18: #{tpu_custom_call.1} parent=11 // pred_check_branch
          %184 = sbr.rel (%p182) target = $region20
        $region19: #{tpu_custom_call.1} parent=11 // pred_region
          _
        $region20: #{tpu_custom_call.1} parent=11 // pred_fallthru
          _
        // Predicated region
        $region21: #{tpu_custom_call.1} parent=11 // pred_check
          %p185 = pneg %p107
        $region22: #{tpu_custom_call.1} parent=11 // pred_check_branch
          %187 = sbr.rel (%p185) target = $region24
        $region23: #{tpu_custom_call.1} parent=11 // pred_region
          %s189 = ssub.s32 1024, 1024
          %190 = vsyncadd [#allocation6], %s189
          %s191 = sshll.u32 [#allocation7], 4
          %s192 = int_to_ptr.vmem [resolvable:$true] %s191
          %197 = dma.hbm_to_vmem [thread:$0]  %s3, 1024, %s192, [#allocation6], 64, 64, 4
        $region24: #{tpu_custom_call.1} parent=11 // pred_fallthru
          _
        // Predicated region
        $region25: #{tpu_custom_call.1} parent=11 // pred_check
          %p198 = pneg %p128
        $region26: #{tpu_custom_call.1} parent=11 // pred_check_branch
          %200 = sbr.rel (%p198) target = $region28
        $region27: #{tpu_custom_call.1} parent=11 // pred_region
          _
        $region28: #{tpu_custom_call.1} parent=11 // pred_fallthru
          _
      $region12: #{tpu_custom_call.1} parent=5 // pred_fallthru
        _
      %p201 = scmp.lt.s32.totalorder %s18, 2
      // Predicated region
      $region29: #{tpu_custom_call.1} parent=5 // pred_check
        %p202 = pneg %p201
      $region30: #{tpu_custom_call.1} parent=5 // pred_check_branch
        %204 = sbr.rel (%p202) target = $region32
      $region31: #{tpu_custom_call.1} parent=5 // pred_region
        // Predicated region
        $region33: #{tpu_custom_call.1} parent=31 // pred_check
          %p205 = pneg %p38
        $region34: #{tpu_custom_call.1} parent=31 // pred_check_branch
          %207 = sbr.rel (%p205) target = $region36
        $region35: #{tpu_custom_call.1} parent=31 // pred_region
          %s208 = sand.u32 %s28, 1
          %s209 = scalar_lea.sflag [#allocation3], %s208
          %s210 = sand.u32 %s28, 1
          %s211 = smul.addr %s210, 8
          %s212 = scalar_lea.vmem [#allocation2], %s211
          %s214 = ssub.s32 128, 128
          %215 = vsyncadd %s209, %s214
          %s216 = smul.addr %s18, 128
          %s217 = scalar_lea.hbm %s0, %s216
          %s219 = sshll.u32 %s212, 4
          %s220 = int_to_ptr.vmem [resolvable:$true] %s219
          %222 = dma.hbm_to_vmem [thread:$0]  %s217, 128, %s220, %s209
        $region36: #{tpu_custom_call.1} parent=31 // pred_fallthru
          _
      $region32: #{tpu_custom_call.1} parent=5 // pred_fallthru
        _
      %p223 = scmp.le.s32.totalorder 1, %s18
      %p224 = scmp.lt.s32.totalorder %s18, 3
      %p225 = pnand %p223, %p224
      %p226 = pneg %p225
      // Predicated region
      $region37: #{tpu_custom_call.1} parent=5 // pred_check
        _
      $region38: #{tpu_custom_call.1} parent=5 // pred_check_branch
        %228 = sbr.rel (%p225) target = $region40
      $region39: #{tpu_custom_call.1} parent=5 // pred_region
        %s229 = ssub.s32 %s18, 1
        %s230 = sand.u32 %s31, 1
        %s231 = scalar_lea.sflag [#allocation3], %s230
        %s232 = sand.u32 %s31, 1
        %s233 = smul.addr %s232, 8
        %s234 = scalar_lea.vmem [#allocation2], %s233
        // Predicated region
        $region41: #{tpu_custom_call.1} parent=39 // pred_check
          %p235 = pneg %p44
        $region42: #{tpu_custom_call.1} parent=39 // pred_check_branch
          %237 = sbr.rel (%p235) target = $region44
        $region43: #{tpu_custom_call.1} parent=39 // pred_region
          %238 = dma.done %s231, 128
        $region44: #{tpu_custom_call.1} parent=39 // pred_fallthru
          _
        // Predicated region
        $region45: #{tpu_custom_call.1} parent=39 // pred_check
          %p239 = pneg %p65
        $region46: #{tpu_custom_call.1} parent=39 // pred_check_branch
          %241 = sbr.rel (%p239) target = $region48
        $region47: #{tpu_custom_call.1} parent=39 // pred_region
          %242 = dma.done [#allocation6], 1024
        $region48: #{tpu_custom_call.1} parent=39 // pred_fallthru
          _
        // Predicated region
        $region49: #{tpu_custom_call.1} parent=39 // pred_check
          %p243 = pneg %p107
        $region50: #{tpu_custom_call.1} parent=39 // pred_check_branch
          %245 = sbr.rel (%p243) target = $region52
        $region51: #{tpu_custom_call.1} parent=39 // pred_region
          %246 = dma.done [#allocation6], 1024
        $region52: #{tpu_custom_call.1} parent=39 // pred_fallthru
          _
        %s247 = sand.u32 %s31, 1
        %s248 = scalar_lea.sflag [#allocation3], %s247
        %s249 = sand.u32 %s31, 1
        %s250 = smul.addr %s249, 8
        %s251 = scalar_lea.vmem [#allocation2], %s250
        %p252 = pneg %p44
        %p253 = pneg %p41
        %p254 = pneg %p65
        %p255 = pneg %p62
        %p256 = pneg %p86
        %p257 = pneg %p83
        %p258 = pneg %p107
        %p259 = pneg %p104
        %p260 = pneg %p128
        %p261 = pneg %p125
        %p262 = pneg %p154
        %p263 = pneg %p151
        %s264 = sand.u32 %s141, 1
        %s265 = scalar_lea.sflag [#allocation4], %s264
        %s266 = sand.u32 %s141, 1
        %s267 = smul.addr %s266, 8
        %s268 = scalar_lea.vmem [#allocation8], %s267
        %v270 = vld [vmem:[%s234] sm:$0xff]
        %v271 = vpack.c.bf16 %v270, %v270
        %v272 = vld [vmem:[#allocation5] sm:$0xf]
        %v273 = vld [vmem:[#allocation5 + $0x4] sm:$0xf]
        %v274 = vld [vmem:[#allocation5 + $0x8] sm:$0xf]
        %v275 = vld [vmem:[#allocation5 + $0xc] sm:$0xf]
        %v276 = vld [vmem:[#allocation5 + $0x10] sm:$0xf]
        %v277 = vld [vmem:[#allocation5 + $0x14] sm:$0xf]
        %v278 = vld [vmem:[#allocation5 + $0x18] sm:$0xf]
        %v279 = vld [vmem:[#allocation5 + $0x1c] sm:$0xf]
        %v280 = vld [vmem:[#allocation5 + $0x20] sm:$0xf]
        %v281 = vld [vmem:[#allocation5 + $0x24] sm:$0xf]
        %v282 = vld [vmem:[#allocation5 + $0x28] sm:$0xf]
        %v283 = vld [vmem:[#allocation5 + $0x2c] sm:$0xf]
        %v284 = vld [vmem:[#allocation5 + $0x30] sm:$0xf]
        %v285 = vld [vmem:[#allocation5 + $0x34] sm:$0xf]
        %v286 = vld [vmem:[#allocation5 + $0x38] sm:$0xf]
        %v287 = vld [vmem:[#allocation5 + $0x3c] sm:$0xf]
        %v288 = vld [vmem:[%s2] sm:$0x1]
        %v290 = vlaneseq
        %v291 = vshrl.u32 %v290, 7
        %v292 = vsub.s32 0, %v291
        %v293 = vrot.slane %v288, %v292
        %v311 = vunpack.c.l.b16 %v272
        %v312 = vunpack.c.l.b16 %v273
        %v313 = vunpack.c.l.b16 %v274
        %v314 = vunpack.c.l.b16 %v275
        %v315 = vunpack.c.l.b16 %v276
        %v316 = vunpack.c.l.b16 %v277
        %v317 = vunpack.c.l.b16 %v278
        %v318 = vunpack.c.l.b16 %v279
        %v319 = vunpack.c.l.b16 %v280
        %v320 = vunpack.c.l.b16 %v281
        %v321 = vunpack.c.l.b16 %v282
        %v322 = vunpack.c.l.b16 %v283
        %v323 = vunpack.c.l.b16 %v284
        %v324 = vunpack.c.l.b16 %v285
        %v325 = vunpack.c.l.b16 %v286
        %v326 = vunpack.c.l.b16 %v287
        %v327 = vpack.c.b16 %v312, %v311
        %v328 = vpack.c.b16 %v314, %v313
        %v329 = vpack.c.b16 %v316, %v315
        %v330 = vpack.c.b16 %v318, %v317
        %v331 = vpack.c.b16 %v320, %v319
        %v332 = vpack.c.b16 %v322, %v321
        %v333 = vpack.c.b16 %v324, %v323
        %v334 = vpack.c.b16 %v326, %v325
        %343 = vmatprep.subr.bf16.mxu0 0
        %344 = vmatpush1.bf16.msra.mxu0 %v334
        %345 = vmatprep.subr.bf16.mxu0 0
        %346 = vmatpush1.bf16.msra.mxu0 %v333
        %347 = vmatprep.subr.bf16.mxu0 0
        %348 = vmatpush1.bf16.msra.mxu0 %v332
        %349 = vmatprep.subr.bf16.mxu0 0
        %350 = vmatpush1.bf16.msra.mxu0 %v331
        %351 = vmatprep.subr.bf16.mxu0 0
        %352 = vmatpush1.bf16.msra.mxu0 %v330
        %353 = vmatprep.subr.bf16.mxu0 0
        %354 = vmatpush1.bf16.msra.mxu0 %v329
        %355 = vmatprep.subr.bf16.mxu0 0
        %356 = vmatpush1.bf16.msra.mxu0 %v328
        %357 = vmatprep.subr.bf16.mxu0 0
        %358 = vmatpush1.bf16.msra.mxu0 %v327
        %359 = vmatprep.subr.bf16.mxu0 0
        %360 = vmatpush2.bf16.msra.mxu0 0
        %361 = vmatprep.subr.bf16.mxu0 0
        %362 = vmatpush2.bf16.msra.mxu0 0
        %363 = vmatprep.subr.bf16.mxu0 0
        %364 = vmatpush2.bf16.msra.mxu0 0
        %365 = vmatprep.subr.bf16.mxu0 0
        %366 = vmatpush2.bf16.msra.mxu0 0
        %367 = vmatprep.subr.bf16.mxu0 0
        %368 = vmatpush2.bf16.msra.mxu0 0
        %369 = vmatprep.subr.bf16.mxu0 0
        %370 = vmatpush2.bf16.msra.mxu0 0
        %371 = vmatprep.subr.bf16.mxu0 0
        %372 = vmatpush2.bf16.msra.mxu0 0
        %373 = vmatprep.subr.bf16.mxu0 0
        %374 = vmatpush2.bf16.msra.mxu0 0
        %375 = vmatprep.mubr.bf16.mxu0 0
        %376 = vmatmul.mubr.bf16.gmra.mxu0 %v271
        %v377 = vpop.f32.mrf.mxu0
        %v378 = vadd.f32 %v293, %v377
        %v379 = vpop.f32.mrf.mxu0
        %v380 = vpop.f32.mrf.mxu0
        %v381 = vpop.f32.mrf.mxu0
        %382 = vdwg.mxu0
        %v383 = vmul.f32 %v378, 0.5
        %v384 = vmul.f32 %v378, 0.70710677
        %v385 = verf.f32.pop %v384
        %v386 = vadd.f32 %v385, 1.0
        %v387 = vmul.f32 %v383, %v386
        %v388 = vpack.c.bf16 %v387, %v387
        %v389 = vld [vmem:[#allocation7] sm:$0xf]
        %v390 = vld [vmem:[#allocation7 + $0x4] sm:$0xf]
        %v391 = vld [vmem:[#allocation7 + $0x8] sm:$0xf]
        %v392 = vld [vmem:[#allocation7 + $0xc] sm:$0xf]
        %v393 = vld [vmem:[#allocation7 + $0x10] sm:$0xf]
        %v394 = vld [vmem:[#allocation7 + $0x14] sm:$0xf]
        %v395 = vld [vmem:[#allocation7 + $0x18] sm:$0xf]
        %v396 = vld [vmem:[#allocation7 + $0x1c] sm:$0xf]
        %v397 = vld [vmem:[#allocation7 + $0x20] sm:$0xf]
        %v398 = vld [vmem:[#allocation7 + $0x24] sm:$0xf]
        %v399 = vld [vmem:[#allocation7 + $0x28] sm:$0xf]
        %v400 = vld [vmem:[#allocation7 + $0x2c] sm:$0xf]
        %v401 = vld [vmem:[#allocation7 + $0x30] sm:$0xf]
        %v402 = vld [vmem:[#allocation7 + $0x34] sm:$0xf]
        %v403 = vld [vmem:[#allocation7 + $0x38] sm:$0xf]
        %v404 = vld [vmem:[#allocation7 + $0x3c] sm:$0xf]
        %v405 = vld [vmem:[%s4] sm:$0x1]
        %v407 = vlaneseq
        %v408 = vshrl.u32 %v407, 7
        %v409 = vsub.s32 0, %v408
        %v410 = vrot.slane %v405, %v409
        %v428 = vunpack.c.l.b16 %v389
        %v429 = vunpack.c.l.b16 %v390
        %v430 = vunpack.c.l.b16 %v391
        %v431 = vunpack.c.l.b16 %v392
        %v432 = vunpack.c.l.b16 %v393
        %v433 = vunpack.c.l.b16 %v394
        %v434 = vunpack.c.l.b16 %v395
        %v435 = vunpack.c.l.b16 %v396
        %v436 = vunpack.c.l.b16 %v397
        %v437 = vunpack.c.l.b16 %v398
        %v438 = vunpack.c.l.b16 %v399
        %v439 = vunpack.c.l.b16 %v400
        %v440 = vunpack.c.l.b16 %v401
        %v441 = vunpack.c.l.b16 %v402
        %v442 = vunpack.c.l.b16 %v403
        %v443 = vunpack.c.l.b16 %v404
        %v444 = vpack.c.b16 %v429, %v428
        %v445 = vpack.c.b16 %v431, %v430
        %v446 = vpack.c.b16 %v433, %v432
        %v447 = vpack.c.b16 %v435, %v434
        %v448 = vpack.c.b16 %v437, %v436
        %v449 = vpack.c.b16 %v439, %v438
        %v450 = vpack.c.b16 %v441, %v440
        %v451 = vpack.c.b16 %v443, %v442
        %460 = vmatprep.subr.bf16.mxu0 0
        %461 = vmatpush1.bf16.msra.mxu0 %v451
        %462 = vmatprep.subr.bf16.mxu0 0
        %463 = vmatpush1.bf16.msra.mxu0 %v450
        %464 = vmatprep.subr.bf16.mxu0 0
        %465 = vmatpush1.bf16.msra.mxu0 %v449
        %466 = vmatprep.subr.bf16.mxu0 0
        %467 = vmatpush1.bf16.msra.mxu0 %v448
        %468 = vmatprep.subr.bf16.mxu0 0
        %469 = vmatpush1.bf16.msra.mxu0 %v447
        %470 = vmatprep.subr.bf16.mxu0 0
        %471 = vmatpush1.bf16.msra.mxu0 %v446
        %472 = vmatprep.subr.bf16.mxu0 0
        %473 = vmatpush1.bf16.msra.mxu0 %v445
        %474 = vmatprep.subr.bf16.mxu0 0
        %475 = vmatpush1.bf16.msra.mxu0 %v444
        %476 = vmatprep.subr.bf16.mxu0 0
        %477 = vmatpush2.bf16.msra.mxu0 0
        %478 = vmatprep.subr.bf16.mxu0 0
        %479 = vmatpush2.bf16.msra.mxu0 0
        %480 = vmatprep.subr.bf16.mxu0 0
        %481 = vmatpush2.bf16.msra.mxu0 0
        %482 = vmatprep.subr.bf16.mxu0 0
        %483 = vmatpush2.bf16.msra.mxu0 0
        %484 = vmatprep.subr.bf16.mxu0 0
        %485 = vmatpush2.bf16.msra.mxu0 0
        %486 = vmatprep.subr.bf16.mxu0 0
        %487 = vmatpush2.bf16.msra.mxu0 0
        %488 = vmatprep.subr.bf16.mxu0 0
        %489 = vmatpush2.bf16.msra.mxu0 0
        %490 = vmatprep.subr.bf16.mxu0 0
        %491 = vmatpush2.bf16.msra.mxu0 0
        %492 = vmatprep.mubr.bf16.mxu0 0
        %493 = vmatmul.mubr.bf16.gmra.mxu0 %v388
        %v494 = vpop.f32.mrf.mxu0
        %v495 = vadd.f32 %v410, %v494
        %v496 = vpop.f32.mrf.mxu0
        %v497 = vpop.f32.mrf.mxu0
        %v498 = vpop.f32.mrf.mxu0
        %499 = vdwg.mxu0
        %500 = vst [vmem:[%s268] sm:$0xff] %v495
        %s501 = sand.u32 %s141, 1
        %s502 = scalar_lea.sflag [#allocation4], %s501
        %s503 = sand.u32 %s141, 1
        %s504 = smul.addr %s503, 8
        %s505 = scalar_lea.vmem [#allocation8], %s504
        // Predicated region
        $region53: #{tpu_custom_call.1} parent=39 // pred_check
          %p506 = pneg %p151
        $region54: #{tpu_custom_call.1} parent=39 // pred_check_branch
          %508 = sbr.rel (%p506) target = $region56
        $region55: #{tpu_custom_call.1} parent=39 // pred_region
          %s510 = ssub.s32 128, 128
          %511 = vsyncadd %s502, %s510
          %s512 = smul.addr %s23, 128
          %s513 = scalar_lea.hbm %s5, %s512
          %s515 = sshll.u32 %s505, 4
          %s516 = int_to_ptr.vmem [resolvable:$true] %s515
          %518 = dma.vmem_to_hbm [thread:$0]  %s516, 128, %s513, %s502
        $region56: #{tpu_custom_call.1} parent=39 // pred_fallthru
          _
      $region40: #{tpu_custom_call.1} parent=5 // pred_fallthru
        _
      %p519 = scmp.le.s32.totalorder 2, %s18
      // Predicated region
      $region57: #{tpu_custom_call.1} parent=5 // pred_check
        %p520 = pneg %p519
      $region58: #{tpu_custom_call.1} parent=5 // pred_check_branch
        %522 = sbr.rel (%p520) target = $region60
      $region59: #{tpu_custom_call.1} parent=5 // pred_region
        %s523 = ssub.s32 %s18, 2
        // Predicated region
        $region61: #{tpu_custom_call.1} parent=59 // pred_check
          %p524 = pneg %p157
        $region62: #{tpu_custom_call.1} parent=59 // pred_check_branch
          %526 = sbr.rel (%p524) target = $region64
        $region63: #{tpu_custom_call.1} parent=59 // pred_region
          %s527 = sand.u32 %s142, 1
          %s528 = scalar_lea.sflag [#allocation4], %s527
          %s529 = sand.u32 %s142, 1
          %s530 = smul.addr %s529, 8
          %s531 = scalar_lea.vmem [#allocation8], %s530
          %532 = dma.done %s528, 128
        $region64: #{tpu_custom_call.1} parent=59 // pred_fallthru
          _
      $region60: #{tpu_custom_call.1} parent=5 // pred_fallthru
        _
    $region6: #{tpu_custom_call.1} parent=1 // loop_footer
      %s22 = sadd.s32 1, %s18
    $region7: #{tpu_custom_call.1} parent=1 // loop_footer_branch
      %17 = sbr.rel target = $region3
    $region8: #{tpu_custom_call.1} parent=1 // loop_exit
      _
    %533 = vsyncpa [#allocation3], 1
    %s534 = scalar_lea.sflag [#allocation3], 1
    %535 = vsyncpa %s534, 1
    %536 = vsyncpa [#allocation6], 1
    %537 = vsyncpa [#allocation4], 1
    %s538 = scalar_lea.sflag [#allocation4], 1
    %539 = vsyncpa %s538, 1

</llo_original>
